<compile_context>
chip_gen: v6e
topology: v6e:2x2x1
jax: 0.10.0
libtpu: 0.0.40
codegen_flags: <defaults>
</compile_context>

<pallas_src>
import jax
import jax.numpy as jnp
from jax.experimental import pallas as pl
from jax.experimental.pallas import tpu as pltpu

_LANE = 128


def _round_up(x, m):
    return (x + m - 1) // m * m


def _cdiv(a, b):
    return (a + b - 1) // b


def _pick_tile_m(m, stream_bytes_per_row):
    """M tile: multiple of 16 (bf16 sublanes), VMEM-aware (double-buffered
    streamed operands <= ~12 MiB/step), and >= 4 grid steps when M allows so
    the 'parallel' axis can shard across both v7x TensorCores."""
    cap = (12 << 20) // max(1, 2 * stream_bytes_per_row)
    cap = max(16, (cap // 16) * 16)
    tm = min(512, cap)
    if m >= 64:
        tm = min(tm, max(16, _round_up(_cdiv(m, 4), 16)))
    elif m >= 32:
        tm = min(tm, max(16, _round_up(_cdiv(m, 2), 16)))
    return max(16, min(tm, _round_up(m, 16)))


# ----------------------------------------------------------------------------
# Pallas kernels (GEMM + bias + SiLU epilogue, optionally fused skip/residual)
# ----------------------------------------------------------------------------
def _gemm_bias_silu_kernel(p_ref, w_ref, b_ref, o_ref):
    # (TM,K)bf16 @ (K,Cpad)bf16 -> f32, + bias, SiLU, bf16 store.
    acc = jnp.dot(p_ref[...], w_ref[...], preferred_element_type=jnp.float32)
    acc = acc + b_ref[...]
    o_ref[...] = (acc * jax.nn.sigmoid(acc)).astype(o_ref.dtype)


def _gemm_bias_silu_skipconv_kernel(p_ref, w_ref, b_ref, s_ref, ws_ref, bs_ref,
                                    o_ref):
    # out = SiLU(p @ w + b) + (s @ ws + bs)   (strided 1x1 skip conv fused)
    acc = jnp.dot(p_ref[...], w_ref[...], preferred_element_type=jnp.float32)
    acc = acc + b_ref[...]
    act = acc * jax.nn.sigmoid(acc)
    skip = jnp.dot(s_ref[...], ws_ref[...], preferred_element_type=jnp.float32)
    skip = skip + bs_ref[...]
    o_ref[...] = (act + skip).astype(o_ref.dtype)


def _gemm_bias_silu_addskip_kernel(p_ref, w_ref, b_ref, s_ref, o_ref):
    # out = SiLU(p @ w + b) + s     (identity skip: plain f32 VPU add, no MXU)
    acc = jnp.dot(p_ref[...], w_ref[...], preferred_element_type=jnp.float32)
    acc = acc + b_ref[...]
    act = acc * jax.nn.sigmoid(acc)
    o_ref[...] = (act + s_ref[...].astype(jnp.float32)).astype(o_ref.dtype)


# ----------------------------------------------------------------------------
# GEMM wrapper: M-tiled, lane-dense K/Cpad, no M pad / output slice
# ----------------------------------------------------------------------------
def _conv_gemm(patches, w_mat, bias, *, skip=None, skip_w=None, skip_b=None,
               out_dtype=jnp.bfloat16):
    """(M,K) @ (K,Cpad) + bias + SiLU, optionally fused with either a 1x1 skip
    conv GEMM (skip_w given) or an identity-skip f32 add (skip only), plus the
    residual add.  Returns (M, Cpad) in out_dtype."""
    M, K = patches.shape
    Cpad = w_mat.shape[1]
    out_bytes = jnp.dtype(out_dtype).itemsize

    stream = K * patches.dtype.itemsize + Cpad * out_bytes
    if skip is not None:
        stream += skip.shape[1] * skip.dtype.itemsize
    TM = _pick_tile_m(M, stream)
    grid = (_cdiv(M, TM),)

    in_specs = [
        pl.BlockSpec((TM, K), lambda i: (i, 0)),
        pl.BlockSpec((K, Cpad), lambda i: (0, 0)),
        pl.BlockSpec((1, Cpad), lambda i: (0, 0)),
    ]
    args = [patches, w_mat, bias]
    flops = 2 * M * K * Cpad
    bytes_accessed = (M * K * patches.dtype.itemsize
                      + K * Cpad * w_mat.dtype.itemsize
                      + Cpad * 4 + M * Cpad * out_bytes)

    if skip is None:
        kernel = _gemm_bias_silu_kernel
    elif skip_w is None:
        kernel = _gemm_bias_silu_addskip_kernel
        in_specs.append(pl.BlockSpec((TM, Cpad), lambda i: (i, 0)))
        args.append(skip)
        bytes_accessed += M * Cpad * skip.dtype.itemsize
    else:
        kernel = _gemm_bias_silu_skipconv_kernel
        Cs = skip.shape[1]
        in_specs += [
            pl.BlockSpec((TM, Cs), lambda i: (i, 0)),
            pl.BlockSpec((Cs, Cpad), lambda i: (0, 0)),
            pl.BlockSpec((1, Cpad), lambda i: (0, 0)),
        ]
        args += [skip, skip_w, skip_b]
        flops += 2 * M * Cs * Cpad
        bytes_accessed += (M * Cs * skip.dtype.itemsize
                           + Cs * Cpad * skip_w.dtype.itemsize + Cpad * 4)

    # VMEM budget from actual tiles (double-buffered streamed tiles + weight
    # slabs), with 2x margin; floor 24 MiB, cap well under v7x's 64 MiB.
    est = 2 * TM * stream + 2 * (K * Cpad * 2 + Cpad * 4)
    if skip is not None and skip_w is not None:
        est += 2 * (skip.shape[1] * Cpad * 2 + Cpad * 4)
    vmem_limit = int(min(48 << 20, max(24 << 20, 2 * est)))

    return pl.pallas_call(
        kernel,
        out_shape=jax.ShapeDtypeStruct((M, Cpad), out_dtype),
        grid=grid,
        in_specs=in_specs,
        out_specs=pl.BlockSpec((TM, Cpad), lambda i: (i, 0)),
        compiler_params=pltpu.CompilerParams(
            dimension_semantics=("parallel",),
            vmem_limit_bytes=vmem_limit),
        cost_estimate=pl.CostEstimate(
            flops=int(flops), transcendentals=int(M * Cpad),
            bytes_accessed=int(bytes_accessed)),
    )(*args)


def _im2col_nhwc(x, k, stride, padding):
    """x: (N,H,W,C) -> ((N*Ho*Wo, C*k*k), (Ho, Wo)).  Patch columns are
    channel-major, (kh,kw)-minor — matches a PyTorch OIHW flatten."""
    n = x.shape[0]
    p = jax.lax.conv_general_dilated_patches(
        x, filter_shape=(k, k), window_strides=(stride, stride),
        padding=((padding, padding), (padding, padding)),
        dimension_numbers=("NHWC", "HWIO", "NHWC"))
    _, ho, wo, kc = p.shape
    return p.reshape(n * ho * wo, kc), (ho, wo)


# ----------------------------------------------------------------------------
# ResBlock equivalent
# ----------------------------------------------------------------------------
class ResBlockPallas:
    """Mirror of the torch ResBlock: conv1(k,stride,pad)+SiLU, conv2(k,1,pad)+SiLU,
    skip = 1x1 strided conv if stride>1 else identity, output = conv path + skip."""

    def __init__(self, key, in_channels, out_channels, kernel_size, stride=1):
        self.cin = in_channels
        self.cout = out_channels
        self.k = kernel_size
        self.stride = stride
        self.pad = (kernel_size - 1) // 2
        # Lane-dense output width (already a 256 multiple for real >=256-channel
        # counts, so v6e/v7x's 256-wide MXU stays full).
        self.cpad = _round_up(out_channels, _LANE)

        def init_conv(k_, cout, cin, kh, kw):
            kw_, kb_ = jax.random.split(k_)
            fan_in = cin * kh * kw
            bound = 1.0 / (fan_in ** 0.5)
            w = jax.random.uniform(kw_, (cout, cin, kh, kw), jnp.float32,
                                   -bound, bound)
            b = jax.random.uniform(kb_, (cout,), jnp.float32, -bound, bound)
            return w, b

        k1, k2, k3 = jax.random.split(key, 3)
        self.w1, self.b1 = init_conv(k1, out_channels, in_channels,
                                     kernel_size, kernel_size)
        self.w2, self.b2 = init_conv(k2, out_channels, out_channels,
                                     kernel_size, kernel_size)
        if stride > 1:
            self.ws, self.bs = init_conv(k3, out_channels, in_channels, 1, 1)
        else:
            self.ws, self.bs = None, None

        # ---- GEMM-ready padded weights / biases, built once (not per call) ----
        cpad = self.cpad
        k1dim = in_channels * kernel_size * kernel_size
        self.k1pad = _round_up(k1dim, _LANE)          # lane-dense K for conv1
        w1m = jnp.zeros((self.k1pad, cpad), jnp.float32)
        w1m = w1m.at[:k1dim, :out_channels].set(self.w1.reshape(out_channels, -1).T)
        self.w1_mat = w1m.astype(jnp.bfloat16)
        self.b1_pad = jnp.zeros((1, cpad), jnp.float32).at[0, :out_channels].set(self.b1)

        # conv2 consumes the cpad-channel intermediate, so pad w2's input-channel
        # dim to cpad; K2 = cpad*k*k is automatically a multiple of 128.
        w2_ipad = jnp.zeros((out_channels, cpad, kernel_size, kernel_size),
                            jnp.float32).at[:, :out_channels].set(self.w2)
        k2dim = cpad * kernel_size * kernel_size
        w2m = jnp.zeros((k2dim, cpad), jnp.float32)
        w2m = w2m.at[:, :out_channels].set(w2_ipad.reshape(out_channels, -1).T)
        self.w2_mat = w2m.astype(jnp.bfloat16)
        self.b2_pad = jnp.zeros((1, cpad), jnp.float32).at[0, :out_channels].set(self.b2)

        if stride > 1:
            wsm = jnp.zeros((in_channels, cpad), jnp.float32)
            wsm = wsm.at[:, :out_channels].set(
                self.ws.reshape(out_channels, in_channels).T)
            self.ws_mat = wsm.astype(jnp.bfloat16)
            self.bs_pad = jnp.zeros((1, cpad), jnp.float32).at[0, :out_channels].set(self.bs)

    def __call__(self, x_nchw):
        n = x_nchw.shape[0]
        cpad = self.cpad
        # NCHW -> NHWC once at the module boundary; bf16 operands for the MXU.
        x_nhwc = jnp.transpose(x_nchw, (0, 2, 3, 1))
        x_bf16 = x_nhwc.astype(jnp.bfloat16)

        # conv1 + SiLU (im2col GEMM).  Output keeps cpad lane-dense channels
        # (padded channels are exactly zero: zero weights + zero bias).
        p1, (h1, w1) = _im2col_nhwc(x_bf16, self.k, self.stride, self.pad)
        if p1.shape[1] != self.k1pad:
            p1 = jnp.pad(p1, ((0, 0), (0, self.k1pad - p1.shape[1])))
        h = _conv_gemm(p1, self.w1_mat, self.b1_pad, out_dtype=jnp.bfloat16)
        h = h.reshape(n, h1, w1, cpad)                 # NHWC between the convs

        # conv2 + SiLU, fused with the skip path and the residual add.
        p2, (h2, w2) = _im2col_nhwc(h, self.k, 1, self.pad)
        m2 = n * h2 * w2
        if self.stride > 1:
            s = x_bf16[:, ::self.stride, ::self.stride, :]
            assert (s.shape[1], s.shape[2]) == (h2, w2)
            s_rows = s.reshape(m2, self.cin)
            out = _conv_gemm(p2, self.w2_mat, self.b2_pad,
                             skip=s_rows, skip_w=self.ws_mat, skip_b=self.bs_pad,
                             out_dtype=jnp.bfloat16)
        else:
            assert self.cin == self.cout, "identity skip needs cin == cout"
            assert (x_nhwc.shape[1], x_nhwc.shape[2]) == (h2, w2)
            # Identity skip: f32 rows, added on the VPU inside the kernel.
            s_rows = x_nhwc.reshape(m2, self.cin)
            s_rows = jnp.pad(s_rows, ((0, 0), (0, cpad - self.cin)))
            out = _conv_gemm(p2, self.w2_mat, self.b2_pad,
                             skip=s_rows, out_dtype=jnp.bfloat16)

        out = out.reshape(n, h2, w2, cpad)[..., :self.cout]
        # NCHW, f32 at the module boundary (matches the torch module's dtype).
        return jnp.transpose(out, (0, 3, 1, 2)).astype(jnp.float32)


# ----------------------------------------------------------------------------
# Pure-JAX f32 reference (PyTorch semantics) for correctness check
# ----------------------------------------------------------------------------
def _ref_forward(model, x):
    def conv(inp, w, b, stride, pad):
        y = jax.lax.conv_general_dilated(
            inp, w, (stride, stride), [(pad, pad), (pad, pad)],
            dimension_numbers=("NCHW", "OIHW", "NCHW"))
        return y + b.reshape(1, -1, 1, 1)

    h = jax.nn.silu(conv(x, model.w1, model.b1, model.stride, model.pad))
    h = jax.nn.silu(conv(h, model.w2, model.b2, 1, model.pad))
    if model.ws is not None:
        skip = conv(x, model.ws, model.bs, model.stride, 0)
    else:
        skip = x
    return h + skip


if __name__ == "__main__":
    key = jax.random.PRNGKey(0)
    kp1, kp2, kd1, kd2 = jax.random.split(key, 4)

    # Case 1: stride=2 -> exercises the fused 1x1 strided skip conv.
    model = ResBlockPallas(kp1, in_channels=4, out_channels=32,
                           kernel_size=3, stride=2)
    x = jax.random.normal(kd1, (2, 4, 16, 16), dtype=jnp.float32)
    out = jax.block_until_ready(jax.jit(lambda v: model(v))(x))
    assert out.shape == (2, 32, 8, 8), out.shape
    ref = jax.block_until_ready(_ref_forward(model, x))
    err = float(jnp.max(jnp.abs(out - ref)))
    assert jnp.allclose(out, ref, atol=5e-2, rtol=5e-2), err

    # Case 2: stride=1 -> identity skip (f32 VPU add) branch.
    model1 = ResBlockPallas(kp2, in_channels=32, out_channels=32,
                            kernel_size=3, stride=1)
    x1 = jax.random.normal(kd2, (2, 32, 8, 8), dtype=jnp.float32)
    out1 = jax.block_until_ready(jax.jit(lambda v: model1(v))(x1))
    assert out1.shape == (2, 32, 8, 8), out1.shape
    ref1 = jax.block_until_ready(_ref_forward(model1, x1))
    err1 = float(jnp.max(jnp.abs(out1 - ref1)))
    assert jnp.allclose(out1, ref1, atol=5e-2, rtol=5e-2), err1

    print("KERNEL_OK")
</pallas_src>

<mosaic_0001>
module attributes {stable_mosaic.version = 11 : i64} {
  func.func @_gemm_bias_silu_kernel(%arg0: i32, %arg1: memref<32x128xbf16, #tpu.memory_space<vmem>>, %arg2: memref<128x128xbf16, #tpu.memory_space<vmem>>, %arg3: memref<1x128xf32, #tpu.memory_space<vmem>>, %arg4: memref<32x128xbf16, #tpu.memory_space<vmem>>) attributes {dimension_semantics = [#tpu.dimension_semantics<parallel>], iteration_bounds = array<i64: 4>, scalar_prefetch = 0 : i64, scratch_operands = 0 : i64, tpu.core_type = #tpu.core_type<tc>, window_params = [{transform_indices = @transform_0, window_bounds = array<i64: 32, 128>}, {pipeline_mode = #tpu.pipeline_mode<synchronous>, transform_indices = @transform_1, window_bounds = array<i64: 128, 128>}, {pipeline_mode = #tpu.pipeline_mode<synchronous>, transform_indices = @transform_2, window_bounds = array<i64: 1, 128>}, {transform_indices = @transform_3, window_bounds = array<i64: 32, 128>}]} {
    %c0 = arith.constant 0 : index
    %c0_0 = arith.constant 0 : index
    %0 = vector.load %arg1[%c0, %c0_0] : memref<32x128xbf16, #tpu.memory_space<vmem>>, vector<32x128xbf16>
    %c0_1 = arith.constant 0 : index
    %c0_2 = arith.constant 0 : index
    %1 = vector.load %arg2[%c0_1, %c0_2] : memref<128x128xbf16, #tpu.memory_space<vmem>>, vector<128x128xbf16>
    %cst = arith.constant dense<0.000000e+00> : vector<32x128xf32>
    %2 = tpu.matmul %0, %1, %cst {dimension_numbers = #tpu.dot_dimension_numbers<[1], [0], [0], [1], [0, 0, 1, 1], [], []>} : vector<32x128xbf16>, vector<128x128xbf16>, vector<32x128xf32> -> vector<32x128xf32>
    %c0_3 = arith.constant 0 : index
    %c0_4 = arith.constant 0 : index
    %3 = vector.load %arg3[%c0_3, %c0_4] : memref<1x128xf32, #tpu.memory_space<vmem>>, vector<1x128xf32>
    %4 = vector.broadcast %3 : vector<1x128xf32> to vector<32x128xf32>
    %5 = arith.addf %2, %4 : vector<32x128xf32>
    %6 = arith.negf %5 : vector<32x128xf32>
    %7 = math.exp %6 : vector<32x128xf32>
    %cst_5 = arith.constant 1.000000e+00 : f32
    %8 = vector.broadcast %cst_5 : f32 to vector<32x128xf32>
    %9 = arith.addf %8, %7 : vector<32x128xf32>
    %10 = arith.divf %8, %9 : vector<32x128xf32>
    %11 = arith.mulf %5, %10 : vector<32x128xf32>
    %12 = arith.truncf %11 : vector<32x128xf32> to vector<32x128xbf16>
    %c0_6 = arith.constant 0 : index
    %c0_7 = arith.constant 0 : index
    %13 = vector.load %arg4[%c0_6, %c0_7] : memref<32x128xbf16, #tpu.memory_space<vmem>>, vector<32x128xbf16>
    tpu.vector_store %arg4[%c0_6, %c0_7], %12 {strides = array<i32>} : memref<32x128xbf16, #tpu.memory_space<vmem>>, vector<32x128xbf16>,
    return
  }
  func.func @transform_0(%arg0: i32) -> (i32, i32) {
    %c0_i32 = arith.constant 0 : i32
    %c0_i32_0 = arith.constant 0 : i32
    return %arg0, %c0_i32 : i32, i32
  }
  func.func @transform_1(%arg0: i32) -> (i32, i32) {
    %c0_i32 = arith.constant 0 : i32
    %c0_i32_0 = arith.constant 0 : i32
    %c0_i32_1 = arith.constant 0 : i32
    return %c0_i32, %c0_i32_0 : i32, i32
  }
  func.func @transform_2(%arg0: i32) -> (i32, i32) {
    %c0_i32 = arith.constant 0 : i32
    %c0_i32_0 = arith.constant 0 : i32
    %c0_i32_1 = arith.constant 0 : i32
    return %c0_i32, %c0_i32_0 : i32, i32
  }
  func.func @transform_3(%arg0: i32) -> (i32, i32) {
    %c0_i32 = arith.constant 0 : i32
    %c0_i32_0 = arith.constant 0 : i32
    return %arg0, %c0_i32 : i32, i32
  }
}

module attributes {stable_mosaic.version = 11 : i64} {
  func.func @_gemm_bias_silu_skipconv_kernel(%arg0: i32, %arg1: memref<32x1152xbf16, #tpu.memory_space<vmem>>, %arg2: memref<1152x128xbf16, #tpu.memory_space<vmem>>, %arg3: memref<1x128xf32, #tpu.memory_space<vmem>>, %arg4: memref<32x4xbf16, #tpu.memory_space<vmem>>, %arg5: memref<4x128xbf16, #tpu.memory_space<vmem>>, %arg6: memref<1x128xf32, #tpu.memory_space<vmem>>, %arg7: memref<32x128xbf16, #tpu.memory_space<vmem>>) attributes {dimension_semantics = [#tpu.dimension_semantics<parallel>], iteration_bounds = array<i64: 4>, scalar_prefetch = 0 : i64, scratch_operands = 0 : i64, tpu.core_type = #tpu.core_type<tc>, window_params = [{transform_indices = @transform_0, window_bounds = array<i64: 32, 1152>}, {pipeline_mode = #tpu.pipeline_mode<synchronous>, transform_indices = @transform_1, window_bounds = array<i64: 1152, 128>}, {pipeline_mode = #tpu.pipeline_mode<synchronous>, transform_indices = @transform_2, window_bounds = array<i64: 1, 128>}, {transform_indices = @transform_3, window_bounds = array<i64: 32, 4>}, {pipeline_mode = #tpu.pipeline_mode<synchronous>, transform_indices = @transform_4, window_bounds = array<i64: 4, 128>}, {pipeline_mode = #tpu.pipeline_mode<synchronous>, transform_indices = @transform_5, window_bounds = array<i64: 1, 128>}, {transform_indices = @transform_6, window_bounds = array<i64: 32, 128>}]} {
    %c0 = arith.constant 0 : index
    %c0_0 = arith.constant 0 : index
    %0 = vector.load %arg1[%c0, %c0_0] : memref<32x1152xbf16, #tpu.memory_space<vmem>>, vector<32x1152xbf16>
    %c0_1 = arith.constant 0 : index
    %c0_2 = arith.constant 0 : index
    %1 = vector.load %arg2[%c0_1, %c0_2] : memref<1152x128xbf16, #tpu.memory_space<vmem>>, vector<1152x128xbf16>
    %cst = arith.constant dense<0.000000e+00> : vector<32x128xf32>
    %2 = tpu.matmul %0, %1, %cst {dimension_numbers = #tpu.dot_dimension_numbers<[1], [0], [0], [1], [0, 0, 1, 1], [], []>} : vector<32x1152xbf16>, vector<1152x128xbf16>, vector<32x128xf32> -> vector<32x128xf32>
    %c0_3 = arith.constant 0 : index
    %c0_4 = arith.constant 0 : index
    %3 = vector.load %arg3[%c0_3, %c0_4] : memref<1x128xf32, #tpu.memory_space<vmem>>, vector<1x128xf32>
    %4 = vector.broadcast %3 : vector<1x128xf32> to vector<32x128xf32>
    %5 = arith.addf %2, %4 : vector<32x128xf32>
    %6 = arith.negf %5 : vector<32x128xf32>
    %7 = math.exp %6 : vector<32x128xf32>
    %cst_5 = arith.constant 1.000000e+00 : f32
    %8 = vector.broadcast %cst_5 : f32 to vector<32x128xf32>
    %9 = arith.addf %8, %7 : vector<32x128xf32>
    %10 = arith.divf %8, %9 : vector<32x128xf32>
    %11 = arith.mulf %5, %10 : vector<32x128xf32>
    %c0_6 = arith.constant 0 : index
    %c0_7 = arith.constant 0 : index
    %12 = vector.load %arg4[%c0_6, %c0_7] : memref<32x4xbf16, #tpu.memory_space<vmem>>, vector<32x4xbf16>
    %c0_8 = arith.constant 0 : index
    %c0_9 = arith.constant 0 : index
    %13 = vector.load %arg5[%c0_8, %c0_9] : memref<4x128xbf16, #tpu.memory_space<vmem>>, vector<4x128xbf16>
    %cst_10 = arith.constant dense<0.000000e+00> : vector<32x128xf32>
    %14 = tpu.matmul %12, %13, %cst_10 {dimension_numbers = #tpu.dot_dimension_numbers<[1], [0], [0], [1], [0, 0, 1, 1], [], []>} : vector<32x4xbf16>, vector<4x128xbf16>, vector<32x128xf32> -> vector<32x128xf32>
    %c0_11 = arith.constant 0 : index
    %c0_12 = arith.constant 0 : index
    %15 = vector.load %arg6[%c0_11, %c0_12] : memref<1x128xf32, #tpu.memory_space<vmem>>, vector<1x128xf32>
    %16 = vector.broadcast %15 : vector<1x128xf32> to vector<32x128xf32>
    %17 = arith.addf %14, %16 : vector<32x128xf32>
    %18 = arith.addf %11, %17 : vector<32x128xf32>
    %19 = arith.truncf %18 : vector<32x128xf32> to vector<32x128xbf16>
    %c0_13 = arith.constant 0 : index
    %c0_14 = arith.constant 0 : index
    %20 = vector.load %arg7[%c0_13, %c0_14] : memref<32x128xbf16, #tpu.memory_space<vmem>>, vector<32x128xbf16>
    tpu.vector_store %arg7[%c0_13, %c0_14], %19 {strides = array<i32>} : memref<32x128xbf16, #tpu.memory_space<vmem>>, vector<32x128xbf16>,
    return
  }
  func.func @transform_0(%arg0: i32) -> (i32, i32) {
    %c0_i32 = arith.constant 0 : i32
    %c0_i32_0 = arith.constant 0 : i32
    return %arg0, %c0_i32 : i32, i32
  }
  func.func @transform_1(%arg0: i32) -> (i32, i32) {
    %c0_i32 = arith.constant 0 : i32
    %c0_i32_0 = arith.constant 0 : i32
    %c0_i32_1 = arith.constant 0 : i32
    return %c0_i32, %c0_i32_0 : i32, i32
  }
  func.func @transform_2(%arg0: i32) -> (i32, i32) {
    %c0_i32 = arith.constant 0 : i32
    %c0_i32_0 = arith.constant 0 : i32
    %c0_i32_1 = arith.constant 0 : i32
    return %c0_i32, %c0_i32_0 : i32, i32
  }
  func.func @transform_3(%arg0: i32) -> (i32, i32) {
    %c0_i32 = arith.constant 0 : i32
    %c0_i32_0 = arith.constant 0 : i32
    return %arg0, %c0_i32 : i32, i32
  }
  func.func @transform_4(%arg0: i32) -> (i32, i32) {
    %c0_i32 = arith.constant 0 : i32
    %c0_i32_0 = arith.constant 0 : i32
    %c0_i32_1 = arith.constant 0 : i32
    return %c0_i32, %c0_i32_0 : i32, i32
  }
  func.func @transform_5(%arg0: i32) -> (i32, i32) {
    %c0_i32 = arith.constant 0 : i32
    %c0_i32_0 = arith.constant 0 : i32
    %c0_i32_1 = arith.constant 0 : i32
    return %c0_i32, %c0_i32_0 : i32, i32
  }
  func.func @transform_6(%arg0: i32) -> (i32, i32) {
    %c0_i32 = arith.constant 0 : i32
    %c0_i32_0 = arith.constant 0 : i32
    return %arg0, %c0_i32 : i32, i32
  }
}

</mosaic_0001>

<llo_original>
// kernel: _lambda_.2
$region0: #{_lambda_.2}
  #allocation0 [shape = 'u32[]', space=smem, size = 0x4, offset = 0x4, fixed_abs, tag = 'smem constant byte address 0x4 - core index']
  #allocation1 [shape = 'u32[144,128]{1,0:T(1,128)}', space=vmem, size = 0x12000, scoped, tag = 'internal scratch']
  %s0 = inlined_call_operand.vmem [shape: bf16[128,128], index: 0, kind: input, shape index: {}]
  %s1 = inlined_call_operand.hbm [shape: bf16[128,128], index: 1, kind: input, shape index: {}]
  %s2 = inlined_call_operand.hbm [shape: f32[1,128], index: 2, kind: input, shape index: {}]
  %s3 = inlined_call_operand.vmem [shape: bf16[128,128], index: 3, kind: output, shape index: {}]
  %s4 = sld [smem:[#allocation0]]
  $region53: #{_lambda_.2} parent=0
    _
  %s6 = ssub.s32 1, %s4
  %s7 = scalar_select 0, %s6, %s4
  $region1: #{_lambda_.2} parent=0
    #allocation2 [shape = 'u8[32768]{0}', space=vmem, size = 0x8000, scoped, tag = 'input window, operand 1, single buffered']
    #allocation3 [shape = 's32[2]{0}', space=sflag, size = 0x8, scoped, tag = 'scoped memory for _lambda_.2']
    #allocation4 [shape = 'u8[512]{0}', space=vmem, size = 0x400, scoped, tag = 'input window, operand 2, single buffered']
    #allocation5 [shape = 's32[1]{0}', space=sflag, size = 0x4, scoped, tag = 'scoped memory for _lambda_.2']
    %8 = vsyncpa [#allocation3], 0
    %9 = vsyncpa [#allocation5], 0
    loop: start=0, step=1, limit=6
    $region2: #{_lambda_.2} parent=1 // loop_pre_header
      _
    $region3: #{_lambda_.2} parent=1 // loop_header
      %s11 = sphi 0, %s15
      %p12 = scmp.ge.s32.totalorder %s11, 6
      %s21 = sphi 0, %s23
      %s24 = sphi 0, %s21
      %s25 = sphi 0, %s24
      %s41 = sphi 0, %s25
      %s45 = sphi 0, %s45
      %s47 = sphi 0, %s45
      %s48 = sphi 0, %s47
      %s62 = sphi 0, %s48
      %s66 = sphi 0, %s66
      %s68 = sphi 0, %s66
      %s69 = sphi 0, %s68
      %s83 = sphi 0, %s69
      %s89 = sphi 0, %s91
      %s92 = sphi 0, %s89
      %s93 = sphi 0, %s92
      %s109 = sphi 0, %s93
    $region4: #{_lambda_.2} parent=1 // loop_header_branch
      %14 = sbr.rel (%p12) target = $region8
    $region5: #{_lambda_.2} parent=1 // loop_body
      %s16 = ssub.s32 %s11, 1
      %s17 = ssub.s32 %s11, 2
      %s18 = sadd.s32 %s11, 1
      %s19 = ssub.s32 %s11, %s18
      %p20 = scmp.eq.s32.totalorder %s19, 0
      %s22 = sadd.s32 %s21, 1
      %s23 = scalar_select %p20, %s21, %s22
      %p26 = pneg %p20
      %p27 = scmp.eq.s32.totalorder %s11, 3
      %p28 = por %p26, %p27
      %p29 = scmp.ne.s32.totalorder %s21, %s24
      %p30 = scmp.eq.s32.totalorder %s11, 0
      %p31 = por %p29, %p30
      %p32 = scmp.ne.s32.totalorder %s21, %s24
      %p33 = scmp.eq.s32.totalorder %s16, 3
      %p34 = por %p32, %p33
      %p35 = scmp.ne.s32.totalorder %s24, %s25
      %p36 = scmp.eq.s32.totalorder %s16, 0
      %p37 = por %p35, %p36
      %p38 = scmp.ne.s32.totalorder %s24, %s25
      %p39 = scmp.eq.s32.totalorder %s17, 3
      %p40 = por %p38, %p39
      %p42 = scmp.ne.s32.totalorder %s25, %s41
      %p43 = scmp.eq.s32.totalorder %s17, 0
      %p44 = por %p42, %p43
      %s46 = sadd.s32 %s45, 1
      %p49 = scmp.eq.s32.totalorder %s11, 3
      %p50 = scmp.ne.s32.totalorder %s45, %s47
      %p51 = scmp.eq.s32.totalorder %s11, 0
      %p52 = por %p50, %p51
      %p53 = scmp.ne.s32.totalorder %s45, %s47
      %p54 = scmp.eq.s32.totalorder %s16, 3
      %p55 = por %p53, %p54
      %p56 = scmp.ne.s32.totalorder %s47, %s48
      %p57 = scmp.eq.s32.totalorder %s16, 0
      %p58 = por %p56, %p57
      %p59 = scmp.ne.s32.totalorder %s47, %s48
      %p60 = scmp.eq.s32.totalorder %s17, 3
      %p61 = por %p59, %p60
      %p63 = scmp.ne.s32.totalorder %s48, %s62
      %p64 = scmp.eq.s32.totalorder %s17, 0
      %p65 = por %p63, %p64
      %s67 = sadd.s32 %s66, 1
      %p70 = scmp.eq.s32.totalorder %s11, 3
      %p71 = scmp.ne.s32.totalorder %s66, %s68
      %p72 = scmp.eq.s32.totalorder %s11, 0
      %p73 = por %p71, %p72
      %p74 = scmp.ne.s32.totalorder %s66, %s68
      %p75 = scmp.eq.s32.totalorder %s16, 3
      %p76 = por %p74, %p75
      %p77 = scmp.ne.s32.totalorder %s68, %s69
      %p78 = scmp.eq.s32.totalorder %s16, 0
      %p79 = por %p77, %p78
      %p80 = scmp.ne.s32.totalorder %s68, %s69
      %p81 = scmp.eq.s32.totalorder %s17, 3
      %p82 = por %p80, %p81
      %p84 = scmp.ne.s32.totalorder %s69, %s83
      %p85 = scmp.eq.s32.totalorder %s17, 0
      %p86 = por %p84, %p85
      %s87 = ssub.s32 %s11, %s18
      %p88 = scmp.eq.s32.totalorder %s87, 0
      %s90 = sadd.s32 %s89, 1
      %s91 = scalar_select %p88, %s89, %s90
      %p94 = pneg %p88
      %p95 = scmp.eq.s32.totalorder %s11, 3
      %p96 = por %p94, %p95
      %p97 = scmp.ne.s32.totalorder %s89, %s92
      %p98 = scmp.eq.s32.totalorder %s11, 0
      %p99 = por %p97, %p98
      %p100 = scmp.ne.s32.totalorder %s89, %s92
      %p101 = scmp.eq.s32.totalorder %s16, 3
      %p102 = por %p100, %p101
      %p103 = scmp.ne.s32.totalorder %s92, %s93
      %p104 = scmp.eq.s32.totalorder %s16, 0
      %p105 = por %p103, %p104
      %p106 = scmp.ne.s32.totalorder %s92, %s93
      %p107 = scmp.eq.s32.totalorder %s17, 3
      %p108 = por %p106, %p107
      %p110 = scmp.ne.s32.totalorder %s93, %s109
      %p111 = scmp.eq.s32.totalorder %s17, 0
      %p112 = por %p110, %p111
      %p113 = scmp.le.s32.totalorder 1, %s11
      %p114 = scmp.lt.s32.totalorder %s11, 5
      %p115 = pnand %p113, %p114
      %p116 = pneg %p115
      // Predicated region
      $region9: #{_lambda_.2} parent=5 // pred_check
        _
      $region10: #{_lambda_.2} parent=5 // pred_check_branch
        %118 = sbr.rel (%p115) target = $region12
      $region11: #{_lambda_.2} parent=5 // pred_region
        %s119 = ssub.s32 %s11, 1
        // Predicated region
        $region13: #{_lambda_.2} parent=11 // pred_check
          %p120 = pneg %p58
        $region14: #{_lambda_.2} parent=11 // pred_check_branch
          %122 = sbr.rel (%p120) target = $region16
        $region15: #{_lambda_.2} parent=11 // pred_region
          %s124 = ssub.s32 1024, 1024
          %125 = vsyncadd [#allocation3], %s124
          %s126 = sshll.u32 [#allocation2], 4
          %s127 = int_to_ptr.vmem [resolvable:$true] %s126
          %132 = dma.hbm_to_vmem [thread:$0]  %s1, 1024, %s127, [#allocation3], 64, 64, 4
        $region16: #{_lambda_.2} parent=11 // pred_fallthru
          _
        // Predicated region
        $region17: #{_lambda_.2} parent=11 // pred_check
          %p133 = pneg %p79
        $region18: #{_lambda_.2} parent=11 // pred_check_branch
          %135 = sbr.rel (%p133) target = $region20
        $region19: #{_lambda_.2} parent=11 // pred_region
          %s137 = ssub.s32 16, 16
          %138 = vsyncadd [#allocation5], %s137
          %s140 = sshll.u32 [#allocation4], 4
          %s141 = int_to_ptr.vmem [resolvable:$true] %s140
          %143 = dma.hbm_to_vmem [thread:$0]  %s2, 16, %s141, [#allocation5]
        $region20: #{_lambda_.2} parent=11 // pred_fallthru
          _
      $region12: #{_lambda_.2} parent=5 // pred_fallthru
        _
      %p144 = scmp.lt.s32.totalorder %s11, 4
      // Predicated region
      $region21: #{_lambda_.2} parent=5 // pred_check
        %p145 = pneg %p144
      $region22: #{_lambda_.2} parent=5 // pred_check_branch
        %147 = sbr.rel (%p145) target = $region24
      $region23: #{_lambda_.2} parent=5 // pred_region
        // Predicated region
        $region25: #{_lambda_.2} parent=23 // pred_check
          %p148 = pneg %p31
        $region26: #{_lambda_.2} parent=23 // pred_check_branch
          %150 = sbr.rel (%p148) target = $region28
        $region27: #{_lambda_.2} parent=23 // pred_region
          %s151 = smul.u32 4, %s11
          %p152 = scmp.lt.s32.totalorder %s151, 15
          %s153 = scalar_select %p152, %s151, 15
          %s154 = smul.addr %s153, 4
          %s155 = scalar_lea.vmem %s0, %s154
          %s156 = smul.u32 4, %s11
        $region28: #{_lambda_.2} parent=23 // pred_fallthru
          _
      $region24: #{_lambda_.2} parent=5 // pred_fallthru
        _
      %p157 = scmp.le.s32.totalorder 1, %s11
      %p158 = scmp.lt.s32.totalorder %s11, 5
      %p159 = pnand %p157, %p158
      %p160 = pneg %p159
      // Predicated region
      $region29: #{_lambda_.2} parent=5 // pred_check
        _
      $region30: #{_lambda_.2} parent=5 // pred_check_branch
        %162 = sbr.rel (%p159) target = $region32
      $region31: #{_lambda_.2} parent=5 // pred_region
        %s163 = ssub.s32 %s11, 1
        // Predicated region
        $region33: #{_lambda_.2} parent=31 // pred_check
          %p164 = pneg %p58
        $region34: #{_lambda_.2} parent=31 // pred_check_branch
          %166 = sbr.rel (%p164) target = $region36
        $region35: #{_lambda_.2} parent=31 // pred_region
          %167 = dma.done [#allocation3], 1024
        $region36: #{_lambda_.2} parent=31 // pred_fallthru
          _
        // Predicated region
        $region37: #{_lambda_.2} parent=31 // pred_check
          %p168 = pneg %p79
        $region38: #{_lambda_.2} parent=31 // pred_check_branch
          %170 = sbr.rel (%p168) target = $region40
        $region39: #{_lambda_.2} parent=31 // pred_region
          %171 = dma.done [#allocation5], 16
        $region40: #{_lambda_.2} parent=31 // pred_fallthru
          _
        %s172 = smul.u32 4, %s16
        %p173 = scmp.lt.s32.totalorder %s172, 15
        %s174 = scalar_select %p173, %s172, 15
        %s175 = smul.addr %s174, 4
        %s176 = scalar_lea.vmem %s0, %s175
        %p177 = pneg %p37
        %p178 = pneg %p34
        %p179 = pneg %p58
        %p180 = pneg %p55
        %p181 = pneg %p79
        %p182 = pneg %p76
        %p183 = pneg %p105
        %p184 = pneg %p102
        %s185 = smul.u32 4, %s16
        %p186 = scmp.lt.s32.totalorder %s185, 15
        %s187 = scalar_select %p186, %s185, 15
        %s188 = smul.addr %s187, 4
        %s189 = scalar_lea.vmem %s3, %s188
        %s190 = smul.u32 4, %s16
        %p191 = scmp.lt.s32.totalorder %s190, 15
        %s192 = scalar_select %p191, %s190, 15
        %s193 = smul.addr %s192, 4
        %s194 = scalar_lea.vmem %s0, %s193
        %s195 = smul.u32 4, %s16
        %s196 = smul.u32 4, %s16
        %p197 = scmp.lt.s32.totalorder %s196, 15
        %s198 = scalar_select %p197, %s196, 15
        %s199 = smul.addr %s198, 4
        %s200 = scalar_lea.vmem %s3, %s199
        %s201 = smul.u32 4, %s16
        %v203 = vld [vmem:[%s194] sm:$0xf]
        %v204 = vld [vmem:[%s194 + $0x4] sm:$0xf]
        %v205 = vld [vmem:[%s194 + $0x8] sm:$0xf]
        %v206 = vld [vmem:[%s194 + $0xc] sm:$0xf]
        %v207 = vld [vmem:[#allocation2] sm:$0xf]
        %v208 = vld [vmem:[#allocation2 + $0x4] sm:$0xf]
        %v209 = vld [vmem:[#allocation2 + $0x8] sm:$0xf]
        %v210 = vld [vmem:[#allocation2 + $0xc] sm:$0xf]
        %v211 = vld [vmem:[#allocation2 + $0x10] sm:$0xf]
        %v212 = vld [vmem:[#allocation2 + $0x14] sm:$0xf]
        %v213 = vld [vmem:[#allocation2 + $0x18] sm:$0xf]
        %v214 = vld [vmem:[#allocation2 + $0x1c] sm:$0xf]
        %v215 = vld [vmem:[#allocation2 + $0x20] sm:$0xf]
        %v216 = vld [vmem:[#allocation2 + $0x24] sm:$0xf]
        %v217 = vld [vmem:[#allocation2 + $0x28] sm:$0xf]
        %v218 = vld [vmem:[#allocation2 + $0x2c] sm:$0xf]
        %v219 = vld [vmem:[#allocation2 + $0x30] sm:$0xf]
        %v220 = vld [vmem:[#allocation2 + $0x34] sm:$0xf]
        %v221 = vld [vmem:[#allocation2 + $0x38] sm:$0xf]
        %v222 = vld [vmem:[#allocation2 + $0x3c] sm:$0xf]
        %v223 = vld [vmem:[#allocation4] sm:$0x1]
        %v225 = vlaneseq
        %v226 = vshrl.u32 %v225, 7
        %v227 = vsub.s32 0, %v226
        %v228 = vrot.slane %v223, %v227
        %v234 = vunpack.c.l.b16 %v203
        %v235 = vunpack.c.l.b16 %v204
        %v236 = vunpack.c.l.b16 %v205
        %v237 = vunpack.c.l.b16 %v206
        %v238 = vpack.c.b16 %v235, %v234
        %v239 = vpack.c.b16 %v237, %v236
        %v258 = vunpack.c.l.b16 %v207
        %v259 = vunpack.c.l.b16 %v208
        %v260 = vunpack.c.l.b16 %v209
        %v261 = vunpack.c.l.b16 %v210
        %v262 = vunpack.c.l.b16 %v211
        %v263 = vunpack.c.l.b16 %v212
        %v264 = vunpack.c.l.b16 %v213
        %v265 = vunpack.c.l.b16 %v214
        %v266 = vunpack.c.l.b16 %v215
        %v267 = vunpack.c.l.b16 %v216
        %v268 = vunpack.c.l.b16 %v217
        %v269 = vunpack.c.l.b16 %v218
        %v270 = vunpack.c.l.b16 %v219
        %v271 = vunpack.c.l.b16 %v220
        %v272 = vunpack.c.l.b16 %v221
        %v273 = vunpack.c.l.b16 %v222
        %v274 = vpack.c.b16 %v259, %v258
        %v275 = vpack.c.b16 %v261, %v260
        %v276 = vpack.c.b16 %v263, %v262
        %v277 = vpack.c.b16 %v265, %v264
        %v278 = vpack.c.b16 %v267, %v266
        %v279 = vpack.c.b16 %v269, %v268
        %v280 = vpack.c.b16 %v271, %v270
        %v281 = vpack.c.b16 %v273, %v272
        %290 = vmatprep.subr.bf16.mxu0 0
        %291 = vmatpush1.bf16.msra.mxu0 %v281
        %292 = vmatprep.subr.bf16.mxu0 0
        %293 = vmatpush1.bf16.msra.mxu0 %v280
        %294 = vmatprep.subr.bf16.mxu0 0
        %295 = vmatpush1.bf16.msra.mxu0 %v279
        %296 = vmatprep.subr.bf16.mxu0 0
        %297 = vmatpush1.bf16.msra.mxu0 %v278
        %298 = vmatprep.subr.bf16.mxu0 0
        %299 = vmatpush1.bf16.msra.mxu0 %v277
        %300 = vmatprep.subr.bf16.mxu0 0
        %301 = vmatpush1.bf16.msra.mxu0 %v276
        %302 = vmatprep.subr.bf16.mxu0 0
        %303 = vmatpush1.bf16.msra.mxu0 %v275
        %304 = vmatprep.subr.bf16.mxu0 0
        %305 = vmatpush1.bf16.msra.mxu0 %v274
        %306 = vmatprep.subr.bf16.mxu0 0
        %307 = vmatpush2.bf16.msra.mxu0 0
        %308 = vmatprep.subr.bf16.mxu0 0
        %309 = vmatpush2.bf16.msra.mxu0 0
        %310 = vmatprep.subr.bf16.mxu0 0
        %311 = vmatpush2.bf16.msra.mxu0 0
        %312 = vmatprep.subr.bf16.mxu0 0
        %313 = vmatpush2.bf16.msra.mxu0 0
        %314 = vmatprep.subr.bf16.mxu0 0
        %315 = vmatpush2.bf16.msra.mxu0 0
        %316 = vmatprep.subr.bf16.mxu0 0
        %317 = vmatpush2.bf16.msra.mxu0 0
        %318 = vmatprep.subr.bf16.mxu0 0
        %319 = vmatpush2.bf16.msra.mxu0 0
        %320 = vmatprep.subr.bf16.mxu0 0
        %321 = vmatpush2.bf16.msra.mxu0 0
        %322 = vmatprep.mubr.bf16.mxu0 0
        %323 = vmatmul.mubr.bf16.gmra.mxu0 %v238
        %v324 = vpop.f32.mrf.mxu0
        %v325 = vadd.f32 %v228, %v324
        %v326 = vpop.f32.mrf.mxu0
        %v327 = vpop.f32.mrf.mxu0
        %v328 = vadd.f32 %v228, %v327
        %v329 = vpop.f32.mrf.mxu0
        %330 = vmatprep.mubr.bf16.mxu0 0
        %331 = vmatmul.mubr.bf16.gmra.mxu0 %v239
        %v332 = vpop.f32.mrf.mxu0
        %v333 = vadd.f32 %v228, %v332
        %v334 = vpop.f32.mrf.mxu0
        %v335 = vpop.f32.mrf.mxu0
        %v336 = vadd.f32 %v228, %v335
        %v337 = vpop.f32.mrf.mxu0
        %338 = vdwg.mxu0
        %v339 = vxor.u32 %v325, 2147483648
        %v340 = vxor.u32 %v328, 2147483648
        %v341 = vxor.u32 %v333, 2147483648
        %v342 = vxor.u32 %v336, 2147483648
        %v343 = vmul.f32 %v339, 1.442695
        %v344 = vpow.pop %v343
        %v345 = vmul.f32 %v340, 1.442695
        %v346 = vpow.pop %v345
        %v347 = vmul.f32 %v341, 1.442695
        %v348 = vpow.pop %v347
        %v349 = vmul.f32 %v342, 1.442695
        %v350 = vpow.pop %v349
        %v351 = vadd.f32 %v344, 1.0
        %v352 = vadd.f32 %v346, 1.0
        %v353 = vadd.f32 %v348, 1.0
        %v354 = vadd.f32 %v350, 1.0
        %v355 = vrcp.pop %v351
        %v356 = vmul.f32 1.0, %v355
        %v357 = vrcp.pop %v352
        %v358 = vmul.f32 1.0, %v357
        %v359 = vrcp.pop %v353
        %v360 = vmul.f32 1.0, %v359
        %v361 = vrcp.pop %v354
        %v362 = vmul.f32 1.0, %v361
        %v363 = vmul.f32 %v325, %v356
        %v364 = vmul.f32 %v328, %v358
        %v365 = vmul.f32 %v333, %v360
        %v366 = vmul.f32 %v336, %v362
        %v367 = vpack.c.bf16 %v364, %v363
        %v368 = vpack.c.bf16 %v366, %v365
        %v371 = vunpack.c.l.b16 %v367
        %v372 = vunpack.c.h.b16 %v367
        %v373 = vunpack.c.l.b16 %v368
        %v374 = vunpack.c.h.b16 %v368
        %v375 = vpack.c.b16 %v371, %v371
        %v376 = vpack.c.b16 %v372, %v372
        %v377 = vpack.c.b16 %v373, %v373
        %v378 = vpack.c.b16 %v374, %v374
        %383 = vst [vmem:[%s200] sm:$0xf] %v375
        %384 = vst [vmem:[%s200 + $0x4] sm:$0xf] %v376
        %385 = vst [vmem:[%s200 + $0x8] sm:$0xf] %v377
        %386 = vst [vmem:[%s200 + $0xc] sm:$0xf] %v378
        %s387 = smul.u32 4, %s16
        %p388 = scmp.lt.s32.totalorder %s387, 15
        %s389 = scalar_select %p388, %s387, 15
        %s390 = smul.addr %s389, 4
        %s391 = scalar_lea.vmem %s3, %s390
        // Predicated region
        $region41: #{_lambda_.2} parent=31 // pred_check
          %p392 = pneg %p102
        $region42: #{_lambda_.2} parent=31 // pred_check_branch
          %394 = sbr.rel (%p392) target = $region44
        $region43: #{_lambda_.2} parent=31 // pred_region
          %s395 = smul.u32 4, %s16
        $region44: #{_lambda_.2} parent=31 // pred_fallthru
          _
      $region32: #{_lambda_.2} parent=5 // pred_fallthru
        _
      %p396 = scmp.le.s32.totalorder 2, %s11
      // Predicated region
      $region45: #{_lambda_.2} parent=5 // pred_check
        %p397 = pneg %p396
      $region46: #{_lambda_.2} parent=5 // pred_check_branch
        %399 = sbr.rel (%p397) target = $region48
      $region47: #{_lambda_.2} parent=5 // pred_region
        %s400 = ssub.s32 %s11, 2
        // Predicated region
        $region49: #{_lambda_.2} parent=47 // pred_check
          %p401 = pneg %p108
        $region50: #{_lambda_.2} parent=47 // pred_check_branch
          %403 = sbr.rel (%p401) target = $region52
        $region51: #{_lambda_.2} parent=47 // pred_region
          %s404 = smul.u32 4, %s17
          %p405 = scmp.lt.s32.totalorder %s404, 15
          %s406 = scalar_select %p405, %s404, 15
          %s407 = smul.addr %s406, 4
          %s408 = scalar_lea.vmem %s3, %s407
        $region52: #{_lambda_.2} parent=47 // pred_fallthru
          _
      $region48: #{_lambda_.2} parent=5 // pred_fallthru
        _
    $region6: #{_lambda_.2} parent=1 // loop_footer
      %s15 = sadd.s32 1, %s11
    $region7: #{_lambda_.2} parent=1 // loop_footer_branch
      %10 = sbr.rel target = $region3
    $region8: #{_lambda_.2} parent=1 // loop_exit
      _
    %409 = vsyncpa [#allocation3], 1
    %s410 = scalar_lea.sflag [#allocation3], 1
    %411 = vsyncpa %s410, 1
    %412 = vsyncpa [#allocation5], 1

// kernel: _lambda_.3
$region0: #{_lambda_.3}
  #allocation0 [shape = 'u32[]', space=smem, size = 0x4, offset = 0x4, fixed_abs, tag = 'smem constant byte address 0x4 - core index']
  #allocation1 [shape = 'u32[144,128]{1,0:T(1,128)}', space=vmem, size = 0x12000, scoped, tag = 'internal scratch']
  %s0 = inlined_call_operand.vmem [shape: bf16[128,1152], index: 0, kind: input, shape index: {}]
  %s1 = inlined_call_operand.vmem [shape: bf16[1152,128], index: 1, kind: input, shape index: {}]
  %s2 = inlined_call_operand.vmem [shape: f32[1,128], index: 2, kind: input, shape index: {}]
  %s3 = inlined_call_operand.vmem [shape: bf16[128,4], index: 3, kind: input, shape index: {}]
  %s4 = inlined_call_operand.vmem [shape: bf16[4,128], index: 4, kind: input, shape index: {}]
  %s5 = inlined_call_operand.vmem [shape: f32[1,128], index: 5, kind: input, shape index: {}]
  %s6 = inlined_call_operand.vmem [shape: bf16[128,128], index: 6, kind: output, shape index: {}]
  %s7 = sld [smem:[#allocation0]]
  $region57: #{_lambda_.3} parent=0
    _
  %s9 = ssub.s32 1, %s7
  %s10 = scalar_select 0, %s9, %s7
  loop: start=0, step=1, limit=6
  $region2: #{_lambda_.3} parent=0 // loop_pre_header
    _
  $region3: #{_lambda_.3} parent=0 // loop_header
    %s12 = sphi 0, %s16
    %p13 = scmp.ge.s32.totalorder %s12, 6
    %s22 = sphi 0, %s24
    %s25 = sphi 0, %s22
    %s26 = sphi 0, %s25
    %s42 = sphi 0, %s26
    %s46 = sphi 0, %s46
    %s48 = sphi 0, %s46
    %s49 = sphi 0, %s48
    %s63 = sphi 0, %s49
    %s67 = sphi 0, %s67
    %s69 = sphi 0, %s67
    %s70 = sphi 0, %s69
    %s84 = sphi 0, %s70
    %s90 = sphi 0, %s92
    %s93 = sphi 0, %s90
    %s94 = sphi 0, %s93
    %s110 = sphi 0, %s94
    %s114 = sphi 0, %s114
    %s116 = sphi 0, %s114
    %s117 = sphi 0, %s116
    %s131 = sphi 0, %s117
    %s135 = sphi 0, %s135
    %s137 = sphi 0, %s135
    %s138 = sphi 0, %s137
    %s152 = sphi 0, %s138
    %s158 = sphi 0, %s160
    %s161 = sphi 0, %s158
    %s162 = sphi 0, %s161
    %s178 = sphi 0, %s162
  $region4: #{_lambda_.3} parent=0 // loop_header_branch
    %15 = sbr.rel (%p13) target = $region8
  $region5: #{_lambda_.3} parent=0 // loop_body
    %s17 = ssub.s32 %s12, 1
    %s18 = ssub.s32 %s12, 2
    %s19 = sadd.s32 %s12, 1
    %s20 = ssub.s32 %s12, %s19
    %p21 = scmp.eq.s32.totalorder %s20, 0
    %s23 = sadd.s32 %s22, 1
    %s24 = scalar_select %p21, %s22, %s23
    %p27 = pneg %p21
    %p28 = scmp.eq.s32.totalorder %s12, 3
    %p29 = por %p27, %p28
    %p30 = scmp.ne.s32.totalorder %s22, %s25
    %p31 = scmp.eq.s32.totalorder %s12, 0
    %p32 = por %p30, %p31
    %p33 = scmp.ne.s32.totalorder %s22, %s25
    %p34 = scmp.eq.s32.totalorder %s17, 3
    %p35 = por %p33, %p34
    %p36 = scmp.ne.s32.totalorder %s25, %s26
    %p37 = scmp.eq.s32.totalorder %s17, 0
    %p38 = por %p36, %p37
    %p39 = scmp.ne.s32.totalorder %s25, %s26
    %p40 = scmp.eq.s32.totalorder %s18, 3
    %p41 = por %p39, %p40
    %p43 = scmp.ne.s32.totalorder %s26, %s42
    %p44 = scmp.eq.s32.totalorder %s18, 0
    %p45 = por %p43, %p44
    %s47 = sadd.s32 %s46, 1
    %p50 = scmp.eq.s32.totalorder %s12, 3
    %p51 = scmp.ne.s32.totalorder %s46, %s48
    %p52 = scmp.eq.s32.totalorder %s12, 0
    %p53 = por %p51, %p52
    %p54 = scmp.ne.s32.totalorder %s46, %s48
    %p55 = scmp.eq.s32.totalorder %s17, 3
    %p56 = por %p54, %p55
    %p57 = scmp.ne.s32.totalorder %s48, %s49
    %p58 = scmp.eq.s32.totalorder %s17, 0
    %p59 = por %p57, %p58
    %p60 = scmp.ne.s32.totalorder %s48, %s49
    %p61 = scmp.eq.s32.totalorder %s18, 3
    %p62 = por %p60, %p61
    %p64 = scmp.ne.s32.totalorder %s49, %s63
    %p65 = scmp.eq.s32.totalorder %s18, 0
    %p66 = por %p64, %p65
    %s68 = sadd.s32 %s67, 1
    %p71 = scmp.eq.s32.totalorder %s12, 3
    %p72 = scmp.ne.s32.totalorder %s67, %s69
    %p73 = scmp.eq.s32.totalorder %s12, 0
    %p74 = por %p72, %p73
    %p75 = scmp.ne.s32.totalorder %s67, %s69
    %p76 = scmp.eq.s32.totalorder %s17, 3
    %p77 = por %p75, %p76
    %p78 = scmp.ne.s32.totalorder %s69, %s70
    %p79 = scmp.eq.s32.totalorder %s17, 0
    %p80 = por %p78, %p79
    %p81 = scmp.ne.s32.totalorder %s69, %s70
    %p82 = scmp.eq.s32.totalorder %s18, 3
    %p83 = por %p81, %p82
    %p85 = scmp.ne.s32.totalorder %s70, %s84
    %p86 = scmp.eq.s32.totalorder %s18, 0
    %p87 = por %p85, %p86
    %s88 = ssub.s32 %s12, %s19
    %p89 = scmp.eq.s32.totalorder %s88, 0
    %s91 = sadd.s32 %s90, 1
    %s92 = scalar_select %p89, %s90, %s91
    %p95 = pneg %p89
    %p96 = scmp.eq.s32.totalorder %s12, 3
    %p97 = por %p95, %p96
    %p98 = scmp.ne.s32.totalorder %s90, %s93
    %p99 = scmp.eq.s32.totalorder %s12, 0
    %p100 = por %p98, %p99
    %p101 = scmp.ne.s32.totalorder %s90, %s93
    %p102 = scmp.eq.s32.totalorder %s17, 3
    %p103 = por %p101, %p102
    %p104 = scmp.ne.s32.totalorder %s93, %s94
    %p105 = scmp.eq.s32.totalorder %s17, 0
    %p106 = por %p104, %p105
    %p107 = scmp.ne.s32.totalorder %s93, %s94
    %p108 = scmp.eq.s32.totalorder %s18, 3
    %p109 = por %p107, %p108
    %p111 = scmp.ne.s32.totalorder %s94, %s110
    %p112 = scmp.eq.s32.totalorder %s18, 0
    %p113 = por %p111, %p112
    %s115 = sadd.s32 %s114, 1
    %p118 = scmp.eq.s32.totalorder %s12, 3
    %p119 = scmp.ne.s32.totalorder %s114, %s116
    %p120 = scmp.eq.s32.totalorder %s12, 0
    %p121 = por %p119, %p120
    %p122 = scmp.ne.s32.totalorder %s114, %s116
    %p123 = scmp.eq.s32.totalorder %s17, 3
    %p124 = por %p122, %p123
    %p125 = scmp.ne.s32.totalorder %s116, %s117
    %p126 = scmp.eq.s32.totalorder %s17, 0
    %p127 = por %p125, %p126
    %p128 = scmp.ne.s32.totalorder %s116, %s117
    %p129 = scmp.eq.s32.totalorder %s18, 3
    %p130 = por %p128, %p129
    %p132 = scmp.ne.s32.totalorder %s117, %s131
    %p133 = scmp.eq.s32.totalorder %s18, 0
    %p134 = por %p132, %p133
    %s136 = sadd.s32 %s135, 1
    %p139 = scmp.eq.s32.totalorder %s12, 3
    %p140 = scmp.ne.s32.totalorder %s135, %s137
    %p141 = scmp.eq.s32.totalorder %s12, 0
    %p142 = por %p140, %p141
    %p143 = scmp.ne.s32.totalorder %s135, %s137
    %p144 = scmp.eq.s32.totalorder %s17, 3
    %p145 = por %p143, %p144
    %p146 = scmp.ne.s32.totalorder %s137, %s138
    %p147 = scmp.eq.s32.totalorder %s17, 0
    %p148 = por %p146, %p147
    %p149 = scmp.ne.s32.totalorder %s137, %s138
    %p150 = scmp.eq.s32.totalorder %s18, 3
    %p151 = por %p149, %p150
    %p153 = scmp.ne.s32.totalorder %s138, %s152
    %p154 = scmp.eq.s32.totalorder %s18, 0
    %p155 = por %p153, %p154
    %s156 = ssub.s32 %s12, %s19
    %p157 = scmp.eq.s32.totalorder %s156, 0
    %s159 = sadd.s32 %s158, 1
    %s160 = scalar_select %p157, %s158, %s159
    %p163 = pneg %p157
    %p164 = scmp.eq.s32.totalorder %s12, 3
    %p165 = por %p163, %p164
    %p166 = scmp.ne.s32.totalorder %s158, %s161
    %p167 = scmp.eq.s32.totalorder %s12, 0
    %p168 = por %p166, %p167
    %p169 = scmp.ne.s32.totalorder %s158, %s161
    %p170 = scmp.eq.s32.totalorder %s17, 3
    %p171 = por %p169, %p170
    %p172 = scmp.ne.s32.totalorder %s161, %s162
    %p173 = scmp.eq.s32.totalorder %s17, 0
    %p174 = por %p172, %p173
    %p175 = scmp.ne.s32.totalorder %s161, %s162
    %p176 = scmp.eq.s32.totalorder %s18, 3
    %p177 = por %p175, %p176
    %p179 = scmp.ne.s32.totalorder %s162, %s178
    %p180 = scmp.eq.s32.totalorder %s18, 0
    %p181 = por %p179, %p180
    %p182 = scmp.le.s32.totalorder 1, %s12
    %p183 = scmp.lt.s32.totalorder %s12, 5
    %p184 = pnand %p182, %p183
    %p185 = pneg %p184
    // Predicated region
    $region9: #{_lambda_.3} parent=5 // pred_check
      _
    $region10: #{_lambda_.3} parent=5 // pred_check_branch
      %187 = sbr.rel (%p184) target = $region12
    $region11: #{_lambda_.3} parent=5 // pred_region
      %s188 = ssub.s32 %s12, 1
      // Predicated region
      $region13: #{_lambda_.3} parent=11 // pred_check
        %p189 = pneg %p59
      $region14: #{_lambda_.3} parent=11 // pred_check_branch
        %191 = sbr.rel (%p189) target = $region16
      $region15: #{_lambda_.3} parent=11 // pred_region
        _
      $region16: #{_lambda_.3} parent=11 // pred_fallthru
        _
      // Predicated region
      $region17: #{_lambda_.3} parent=11 // pred_check
        %p192 = pneg %p80
      $region18: #{_lambda_.3} parent=11 // pred_check_branch
        %194 = sbr.rel (%p192) target = $region20
      $region19: #{_lambda_.3} parent=11 // pred_region
        _
      $region20: #{_lambda_.3} parent=11 // pred_fallthru
        _
      // Predicated region
      $region21: #{_lambda_.3} parent=11 // pred_check
        %p195 = pneg %p127
      $region22: #{_lambda_.3} parent=11 // pred_check_branch
        %197 = sbr.rel (%p195) target = $region24
      $region23: #{_lambda_.3} parent=11 // pred_region
        _
      $region24: #{_lambda_.3} parent=11 // pred_fallthru
        _
      // Predicated region
      $region25: #{_lambda_.3} parent=11 // pred_check
        %p198 = pneg %p148
      $region26: #{_lambda_.3} parent=11 // pred_check_branch
        %200 = sbr.rel (%p198) target = $region28
      $region27: #{_lambda_.3} parent=11 // pred_region
        _
      $region28: #{_lambda_.3} parent=11 // pred_fallthru
        _
    $region12: #{_lambda_.3} parent=5 // pred_fallthru
      _
    %p201 = scmp.lt.s32.totalorder %s12, 4
    // Predicated region
    $region29: #{_lambda_.3} parent=5 // pred_check
      %p202 = pneg %p201
    $region30: #{_lambda_.3} parent=5 // pred_check_branch
      %204 = sbr.rel (%p202) target = $region32
    $region31: #{_lambda_.3} parent=5 // pred_region
      // Predicated region
      $region33: #{_lambda_.3} parent=31 // pred_check
        %p205 = pneg %p32
      $region34: #{_lambda_.3} parent=31 // pred_check_branch
        %207 = sbr.rel (%p205) target = $region36
      $region35: #{_lambda_.3} parent=31 // pred_region
        %s208 = smul.u32 4, %s12
        %p209 = scmp.lt.s32.totalorder %s208, 15
        %s210 = scalar_select %p209, %s208, 15
        %s211 = smul.addr %s210, 9
        %s212 = smul.addr %s211, 4
        %s213 = scalar_lea.vmem %s0, %s212
        %s214 = smul.u32 4, %s12
      $region36: #{_lambda_.3} parent=31 // pred_fallthru
        _
      // Predicated region
      $region37: #{_lambda_.3} parent=31 // pred_check
        %p215 = pneg %p100
      $region38: #{_lambda_.3} parent=31 // pred_check_branch
        %217 = sbr.rel (%p215) target = $region40
      $region39: #{_lambda_.3} parent=31 // pred_region
        %s218 = smul.u32 4, %s12
        %p219 = scmp.lt.s32.totalorder %s218, 15
        %s220 = scalar_select %p219, %s218, 15
        %s221 = smul.addr %s220, 4
        %s222 = scalar_lea.vmem %s3, %s221
        %s223 = smul.u32 4, %s12
      $region40: #{_lambda_.3} parent=31 // pred_fallthru
        _
    $region32: #{_lambda_.3} parent=5 // pred_fallthru
      _
    %p224 = scmp.le.s32.totalorder 1, %s12
    %p225 = scmp.lt.s32.totalorder %s12, 5
    %p226 = pnand %p224, %p225
    %p227 = pneg %p226
    // Predicated region
    $region41: #{_lambda_.3} parent=5 // pred_check
      _
    $region42: #{_lambda_.3} parent=5 // pred_check_branch
      %229 = sbr.rel (%p226) target = $region44
    $region43: #{_lambda_.3} parent=5 // pred_region
      %s230 = ssub.s32 %s12, 1
      %s231 = smul.u32 4, %s17
      %p232 = scmp.lt.s32.totalorder %s231, 15
      %s233 = scalar_select %p232, %s231, 15
      %s234 = smul.addr %s233, 9
      %s235 = smul.addr %s234, 4
      %s236 = scalar_lea.vmem %s0, %s235
      %p237 = pneg %p38
      %p238 = pneg %p35
      %p239 = pneg %p59
      %p240 = pneg %p56
      %p241 = pneg %p80
      %p242 = pneg %p77
      %s243 = smul.u32 4, %s17
      %p244 = scmp.lt.s32.totalorder %s243, 15
      %s245 = scalar_select %p244, %s243, 15
      %s246 = smul.addr %s245, 4
      %s247 = scalar_lea.vmem %s3, %s246
      %p248 = pneg %p106
      %p249 = pneg %p103
      %p250 = pneg %p127
      %p251 = pneg %p124
      %p252 = pneg %p148
      %p253 = pneg %p145
      %p254 = pneg %p174
      %p255 = pneg %p171
      %s256 = smul.u32 4, %s17
      %p257 = scmp.lt.s32.totalorder %s256, 15
      %s258 = scalar_select %p257, %s256, 15
      %s259 = smul.addr %s258, 4
      %s260 = scalar_lea.vmem %s6, %s259
      %s261 = smul.u32 4, %s17
      %p262 = scmp.lt.s32.totalorder %s261, 15
      %s263 = scalar_select %p262, %s261, 15
      %s264 = smul.addr %s263, 9
      %s265 = smul.addr %s264, 4
      %s266 = scalar_lea.vmem %s0, %s265
      %s267 = smul.u32 4, %s17
      %s268 = smul.u32 4, %s17
      %p269 = scmp.lt.s32.totalorder %s268, 15
      %s270 = scalar_select %p269, %s268, 15
      %s271 = smul.addr %s270, 4
      %s272 = scalar_lea.vmem %s3, %s271
      %s273 = smul.u32 4, %s17
      %s274 = smul.u32 4, %s17
      %p275 = scmp.lt.s32.totalorder %s274, 15
      %s276 = scalar_select %p275, %s274, 15
      %s277 = smul.addr %s276, 4
      %s278 = scalar_lea.vmem %s6, %s277
      %s279 = smul.u32 4, %s17
      %v281 = vld [vmem:[%s266] sm:$0xff]
      %v282 = vld [vmem:[%s266 + $0x8] sm:$0xff]
      %v283 = vld [vmem:[%s266 + $0x10] sm:$0xff]
      %v284 = vld [vmem:[%s266 + $0x18] sm:$0xff]
      %v285 = vld [vmem:[%s266 + $0x20] sm:$0xf]
      %v286 = vld [vmem:[%s266 + $0x24] sm:$0xff]
      %v287 = vld [vmem:[%s266 + $0x2c] sm:$0xff]
      %v288 = vld [vmem:[%s266 + $0x34] sm:$0xff]
      %v289 = vld [vmem:[%s266 + $0x3c] sm:$0xff]
      %v290 = vld [vmem:[%s266 + $0x44] sm:$0xf]
      %v291 = vld [vmem:[%s266 + $0x48] sm:$0xff]
      %v292 = vld [vmem:[%s266 + $0x50] sm:$0xff]
      %v293 = vld [vmem:[%s266 + $0x58] sm:$0xff]
      %v294 = vld [vmem:[%s266 + $0x60] sm:$0xff]
      %v295 = vld [vmem:[%s266 + $0x68] sm:$0xf]
      %v296 = vld [vmem:[%s266 + $0x6c] sm:$0xff]
      %v297 = vld [vmem:[%s266 + $0x74] sm:$0xff]
      %v298 = vld [vmem:[%s266 + $0x7c] sm:$0xff]
      %v299 = vld [vmem:[%s266 + $0x84] sm:$0xff]
      %v300 = vld [vmem:[%s266 + $0x8c] sm:$0xf]
      %v301 = vld [vmem:[%s1] sm:$0xf]
      %v302 = vld [vmem:[%s1 + $0x4] sm:$0xf]
      %v303 = vld [vmem:[%s1 + $0x8] sm:$0xf]
      %v304 = vld [vmem:[%s1 + $0xc] sm:$0xf]
      %v305 = vld [vmem:[%s1 + $0x10] sm:$0xf]
      %v306 = vld [vmem:[%s1 + $0x14] sm:$0xf]
      %v307 = vld [vmem:[%s1 + $0x18] sm:$0xf]
      %v308 = vld [vmem:[%s1 + $0x1c] sm:$0xf]
      %v309 = vld [vmem:[%s1 + $0x20] sm:$0xf]
      %v310 = vld [vmem:[%s1 + $0x24] sm:$0xf]
      %v311 = vld [vmem:[%s1 + $0x28] sm:$0xf]
      %v312 = vld [vmem:[%s1 + $0x2c] sm:$0xf]
      %v313 = vld [vmem:[%s1 + $0x30] sm:$0xf]
      %v314 = vld [vmem:[%s1 + $0x34] sm:$0xf]
      %v315 = vld [vmem:[%s1 + $0x38] sm:$0xf]
      %v316 = vld [vmem:[%s1 + $0x3c] sm:$0xf]
      %v317 = vld [vmem:[%s1 + $0x40] sm:$0xf]
      %v318 = vld [vmem:[%s1 + $0x44] sm:$0xf]
      %v319 = vld [vmem:[%s1 + $0x48] sm:$0xf]
      %v320 = vld [vmem:[%s1 + $0x4c] sm:$0xf]
      %v321 = vld [vmem:[%s1 + $0x50] sm:$0xf]
      %v322 = vld [vmem:[%s1 + $0x54] sm:$0xf]
      %v323 = vld [vmem:[%s1 + $0x58] sm:$0xf]
      %v324 = vld [vmem:[%s1 + $0x5c] sm:$0xf]
      %v325 = vld [vmem:[%s1 + $0x60] sm:$0xf]
      %v326 = vld [vmem:[%s1 + $0x64] sm:$0xf]
      %v327 = vld [vmem:[%s1 + $0x68] sm:$0xf]
      %v328 = vld [vmem:[%s1 + $0x6c] sm:$0xf]
      %v329 = vld [vmem:[%s1 + $0x70] sm:$0xf]
      %v330 = vld [vmem:[%s1 + $0x74] sm:$0xf]
      %v331 = vld [vmem:[%s1 + $0x78] sm:$0xf]
      %v332 = vld [vmem:[%s1 + $0x7c] sm:$0xf]
      %v333 = vld [vmem:[%s1 + $0x80] sm:$0xf]
      %v334 = vld [vmem:[%s1 + $0x84] sm:$0xf]
      %v335 = vld [vmem:[%s1 + $0x88] sm:$0xf]
      %v336 = vld [vmem:[%s1 + $0x8c] sm:$0xf]
      %v337 = vld [vmem:[%s1 + $0x90] sm:$0xf]
      %v338 = vld [vmem:[%s1 + $0x94] sm:$0xf]
      %v339 = vld [vmem:[%s1 + $0x98] sm:$0xf]
      %v340 = vld [vmem:[%s1 + $0x9c] sm:$0xf]
      %v341 = vld [vmem:[%s1 + $0xa0] sm:$0xf]
      %v342 = vld [vmem:[%s1 + $0xa4] sm:$0xf]
      %v343 = vld [vmem:[%s1 + $0xa8] sm:$0xf]
      %v344 = vld [vmem:[%s1 + $0xac] sm:$0xf]
      %v345 = vld [vmem:[%s1 + $0xb0] sm:$0xf]
      %v346 = vld [vmem:[%s1 + $0xb4] sm:$0xf]
      %v347 = vld [vmem:[%s1 + $0xb8] sm:$0xf]
      %v348 = vld [vmem:[%s1 + $0xbc] sm:$0xf]
      %v349 = vld [vmem:[%s1 + $0xc0] sm:$0xf]
      %v350 = vld [vmem:[%s1 + $0xc4] sm:$0xf]
      %v351 = vld [vmem:[%s1 + $0xc8] sm:$0xf]
      %v352 = vld [vmem:[%s1 + $0xcc] sm:$0xf]
      %v353 = vld [vmem:[%s1 + $0xd0] sm:$0xf]
      %v354 = vld [vmem:[%s1 + $0xd4] sm:$0xf]
      %v355 = vld [vmem:[%s1 + $0xd8] sm:$0xf]
      %v356 = vld [vmem:[%s1 + $0xdc] sm:$0xf]
      %v357 = vld [vmem:[%s1 + $0xe0] sm:$0xf]
      %v358 = vld [vmem:[%s1 + $0xe4] sm:$0xf]
      %v359 = vld [vmem:[%s1 + $0xe8] sm:$0xf]
      %v360 = vld [vmem:[%s1 + $0xec] sm:$0xf]
      %v361 = vld [vmem:[%s1 + $0xf0] sm:$0xf]
      %v362 = vld [vmem:[%s1 + $0xf4] sm:$0xf]
      %v363 = vld [vmem:[%s1 + $0xf8] sm:$0xf]
      %v364 = vld [vmem:[%s1 + $0xfc] sm:$0xf]
      %v365 = vld [vmem:[%s1 + $0x100] sm:$0xf]
      %v366 = vld [vmem:[%s1 + $0x104] sm:$0xf]
      %v367 = vld [vmem:[%s1 + $0x108] sm:$0xf]
      %v368 = vld [vmem:[%s1 + $0x10c] sm:$0xf]
      %v369 = vld [vmem:[%s1 + $0x110] sm:$0xf]
      %v370 = vld [vmem:[%s1 + $0x114] sm:$0xf]
      %v371 = vld [vmem:[%s1 + $0x118] sm:$0xf]
      %v372 = vld [vmem:[%s1 + $0x11c] sm:$0xf]
      %v373 = vld [vmem:[%s1 + $0x120] sm:$0xf]
      %v374 = vld [vmem:[%s1 + $0x124] sm:$0xf]
      %v375 = vld [vmem:[%s1 + $0x128] sm:$0xf]
      %v376 = vld [vmem:[%s1 + $0x12c] sm:$0xf]
      %v377 = vld [vmem:[%s1 + $0x130] sm:$0xf]
      %v378 = vld [vmem:[%s1 + $0x134] sm:$0xf]
      %v379 = vld [vmem:[%s1 + $0x138] sm:$0xf]
      %v380 = vld [vmem:[%s1 + $0x13c] sm:$0xf]
      %v381 = vld [vmem:[%s1 + $0x140] sm:$0xf]
      %v382 = vld [vmem:[%s1 + $0x144] sm:$0xf]
      %v383 = vld [vmem:[%s1 + $0x148] sm:$0xf]
      %v384 = vld [vmem:[%s1 + $0x14c] sm:$0xf]
      %v385 = vld [vmem:[%s1 + $0x150] sm:$0xf]
      %v386 = vld [vmem:[%s1 + $0x154] sm:$0xf]
      %v387 = vld [vmem:[%s1 + $0x158] sm:$0xf]
      %v388 = vld [vmem:[%s1 + $0x15c] sm:$0xf]
      %v389 = vld [vmem:[%s1 + $0x160] sm:$0xf]
      %v390 = vld [vmem:[%s1 + $0x164] sm:$0xf]
      %v391 = vld [vmem:[%s1 + $0x168] sm:$0xf]
      %v392 = vld [vmem:[%s1 + $0x16c] sm:$0xf]
      %v393 = vld [vmem:[%s1 + $0x170] sm:$0xf]
      %v394 = vld [vmem:[%s1 + $0x174] sm:$0xf]
      %v395 = vld [vmem:[%s1 + $0x178] sm:$0xf]
      %v396 = vld [vmem:[%s1 + $0x17c] sm:$0xf]
      %v397 = vld [vmem:[%s1 + $0x180] sm:$0xf]
      %v398 = vld [vmem:[%s1 + $0x184] sm:$0xf]
      %v399 = vld [vmem:[%s1 + $0x188] sm:$0xf]
      %v400 = vld [vmem:[%s1 + $0x18c] sm:$0xf]
      %v401 = vld [vmem:[%s1 + $0x190] sm:$0xf]
      %v402 = vld [vmem:[%s1 + $0x194] sm:$0xf]
      %v403 = vld [vmem:[%s1 + $0x198] sm:$0xf]
      %v404 = vld [vmem:[%s1 + $0x19c] sm:$0xf]
      %v405 = vld [vmem:[%s1 + $0x1a0] sm:$0xf]
      %v406 = vld [vmem:[%s1 + $0x1a4] sm:$0xf]
      %v407 = vld [vmem:[%s1 + $0x1a8] sm:$0xf]
      %v408 = vld [vmem:[%s1 + $0x1ac] sm:$0xf]
      %v409 = vld [vmem:[%s1 + $0x1b0] sm:$0xf]
      %v410 = vld [vmem:[%s1 + $0x1b4] sm:$0xf]
      %v411 = vld [vmem:[%s1 + $0x1b8] sm:$0xf]
      %v412 = vld [vmem:[%s1 + $0x1bc] sm:$0xf]
      %v413 = vld [vmem:[%s1 + $0x1c0] sm:$0xf]
      %v414 = vld [vmem:[%s1 + $0x1c4] sm:$0xf]
      %v415 = vld [vmem:[%s1 + $0x1c8] sm:$0xf]
      %v416 = vld [vmem:[%s1 + $0x1cc] sm:$0xf]
      %v417 = vld [vmem:[%s1 + $0x1d0] sm:$0xf]
      %v418 = vld [vmem:[%s1 + $0x1d4] sm:$0xf]
      %v419 = vld [vmem:[%s1 + $0x1d8] sm:$0xf]
      %v420 = vld [vmem:[%s1 + $0x1dc] sm:$0xf]
      %v421 = vld [vmem:[%s1 + $0x1e0] sm:$0xf]
      %v422 = vld [vmem:[%s1 + $0x1e4] sm:$0xf]
      %v423 = vld [vmem:[%s1 + $0x1e8] sm:$0xf]
      %v424 = vld [vmem:[%s1 + $0x1ec] sm:$0xf]
      %v425 = vld [vmem:[%s1 + $0x1f0] sm:$0xf]
      %v426 = vld [vmem:[%s1 + $0x1f4] sm:$0xf]
      %v427 = vld [vmem:[%s1 + $0x1f8] sm:$0xf]
      %v428 = vld [vmem:[%s1 + $0x1fc] sm:$0xf]
      %v429 = vld [vmem:[%s1 + $0x200] sm:$0xf]
      %v430 = vld [vmem:[%s1 + $0x204] sm:$0xf]
      %v431 = vld [vmem:[%s1 + $0x208] sm:$0xf]
      %v432 = vld [vmem:[%s1 + $0x20c] sm:$0xf]
      %v433 = vld [vmem:[%s1 + $0x210] sm:$0xf]
      %v434 = vld [vmem:[%s1 + $0x214] sm:$0xf]
      %v435 = vld [vmem:[%s1 + $0x218] sm:$0xf]
      %v436 = vld [vmem:[%s1 + $0x21c] sm:$0xf]
      %v437 = vld [vmem:[%s1 + $0x220] sm:$0xf]
      %v438 = vld [vmem:[%s1 + $0x224] sm:$0xf]
      %v439 = vld [vmem:[%s1 + $0x228] sm:$0xf]
      %v440 = vld [vmem:[%s1 + $0x22c] sm:$0xf]
      %v441 = vld [vmem:[%s1 + $0x230] sm:$0xf]
      %v442 = vld [vmem:[%s1 + $0x234] sm:$0xf]
      %v443 = vld [vmem:[%s1 + $0x238] sm:$0xf]
      %v444 = vld [vmem:[%s1 + $0x23c] sm:$0xf]
      %v445 = vld [vmem:[%s2] sm:$0x1]
      %v447 = vlaneseq
      %v448 = vshrl.u32 %v447, 7
      %v449 = vsub.s32 0, %v448
      %v450 = vrot.slane %v445, %v449
      %v472 = vunpack.c.l.b16 %v281
      %v473 = vunpack.c.h.b16 %v281
      %v474 = vunpack.c.l.b16 %v282
      %v475 = vunpack.c.h.b16 %v282
      %v476 = vunpack.c.l.b16 %v283
      %v477 = vunpack.c.h.b16 %v283
      %v478 = vunpack.c.l.b16 %v284
      %v479 = vunpack.c.h.b16 %v284
      %v480 = vunpack.c.l.b16 %v285
      %v481 = vunpack.c.l.b16 %v286
      %v482 = vunpack.c.h.b16 %v286
      %v483 = vunpack.c.l.b16 %v287
      %v484 = vunpack.c.h.b16 %v287
      %v485 = vunpack.c.l.b16 %v288
      %v486 = vunpack.c.h.b16 %v288
      %v487 = vunpack.c.l.b16 %v289
      %v488 = vunpack.c.h.b16 %v289
      %v489 = vunpack.c.l.b16 %v290
      %v490 = vunpack.c.l.b16 %v291
      %v491 = vunpack.c.h.b16 %v291
      %v492 = vunpack.c.l.b16 %v292
      %v493 = vunpack.c.h.b16 %v292
      %v494 = vunpack.c.l.b16 %v293
      %v495 = vunpack.c.h.b16 %v293
      %v496 = vunpack.c.l.b16 %v294
      %v497 = vunpack.c.h.b16 %v294
      %v498 = vunpack.c.l.b16 %v295
      %v499 = vunpack.c.l.b16 %v296
      %v500 = vunpack.c.h.b16 %v296
      %v501 = vunpack.c.l.b16 %v297
      %v502 = vunpack.c.h.b16 %v297
      %v503 = vunpack.c.l.b16 %v298
      %v504 = vunpack.c.h.b16 %v298
      %v505 = vunpack.c.l.b16 %v299
      %v506 = vunpack.c.h.b16 %v299
      %v507 = vunpack.c.l.b16 %v300
      %v508 = vpack.c.b16 %v481, %v472
      %v509 = vpack.c.b16 %v482, %v473
      %v510 = vpack.c.b16 %v483, %v474
      %v511 = vpack.c.b16 %v484, %v475
      %v512 = vpack.c.b16 %v485, %v476
      %v513 = vpack.c.b16 %v486, %v477
      %v514 = vpack.c.b16 %v487, %v478
      %v515 = vpack.c.b16 %v488, %v479
      %v516 = vpack.c.b16 %v489, %v480
      %v517 = vpack.c.b16 %v499, %v490
      %v518 = vpack.c.b16 %v500, %v491
      %v519 = vpack.c.b16 %v501, %v492
      %v520 = vpack.c.b16 %v502, %v493
      %v521 = vpack.c.b16 %v503, %v494
      %v522 = vpack.c.b16 %v504, %v495
      %v523 = vpack.c.b16 %v505, %v496
      %v524 = vpack.c.b16 %v506, %v497
      %v525 = vpack.c.b16 %v507, %v498
      %v688 = vunpack.c.l.b16 %v301
      %v689 = vunpack.c.l.b16 %v302
      %v690 = vunpack.c.l.b16 %v303
      %v691 = vunpack.c.l.b16 %v304
      %v692 = vunpack.c.l.b16 %v305
      %v693 = vunpack.c.l.b16 %v306
      %v694 = vunpack.c.l.b16 %v307
      %v695 = vunpack.c.l.b16 %v308
      %v696 = vunpack.c.l.b16 %v309
      %v697 = vunpack.c.l.b16 %v310
      %v698 = vunpack.c.l.b16 %v311
      %v699 = vunpack.c.l.b16 %v312
      %v700 = vunpack.c.l.b16 %v313
      %v701 = vunpack.c.l.b16 %v314
      %v702 = vunpack.c.l.b16 %v315
      %v703 = vunpack.c.l.b16 %v316
      %v704 = vunpack.c.l.b16 %v317
      %v705 = vunpack.c.l.b16 %v318
      %v706 = vunpack.c.l.b16 %v319
      %v707 = vunpack.c.l.b16 %v320
      %v708 = vunpack.c.l.b16 %v321
      %v709 = vunpack.c.l.b16 %v322
      %v710 = vunpack.c.l.b16 %v323
      %v711 = vunpack.c.l.b16 %v324
      %v712 = vunpack.c.l.b16 %v325
      %v713 = vunpack.c.l.b16 %v326
      %v714 = vunpack.c.l.b16 %v327
      %v715 = vunpack.c.l.b16 %v328
      %v716 = vunpack.c.l.b16 %v329
      %v717 = vunpack.c.l.b16 %v330
      %v718 = vunpack.c.l.b16 %v331
      %v719 = vunpack.c.l.b16 %v332
      %v720 = vunpack.c.l.b16 %v333
      %v721 = vunpack.c.l.b16 %v334
      %v722 = vunpack.c.l.b16 %v335
      %v723 = vunpack.c.l.b16 %v336
      %v724 = vunpack.c.l.b16 %v337
      %v725 = vunpack.c.l.b16 %v338
      %v726 = vunpack.c.l.b16 %v339
      %v727 = vunpack.c.l.b16 %v340
      %v728 = vunpack.c.l.b16 %v341
      %v729 = vunpack.c.l.b16 %v342
      %v730 = vunpack.c.l.b16 %v343
      %v731 = vunpack.c.l.b16 %v344
      %v732 = vunpack.c.l.b16 %v345
      %v733 = vunpack.c.l.b16 %v346
      %v734 = vunpack.c.l.b16 %v347
      %v735 = vunpack.c.l.b16 %v348
      %v736 = vunpack.c.l.b16 %v349
      %v737 = vunpack.c.l.b16 %v350
      %v738 = vunpack.c.l.b16 %v351
      %v739 = vunpack.c.l.b16 %v352
      %v740 = vunpack.c.l.b16 %v353
      %v741 = vunpack.c.l.b16 %v354
      %v742 = vunpack.c.l.b16 %v355
      %v743 = vunpack.c.l.b16 %v356
      %v744 = vunpack.c.l.b16 %v357
      %v745 = vunpack.c.l.b16 %v358
      %v746 = vunpack.c.l.b16 %v359
      %v747 = vunpack.c.l.b16 %v360
      %v748 = vunpack.c.l.b16 %v361
      %v749 = vunpack.c.l.b16 %v362
      %v750 = vunpack.c.l.b16 %v363
      %v751 = vunpack.c.l.b16 %v364
      %v752 = vunpack.c.l.b16 %v365
      %v753 = vunpack.c.l.b16 %v366
      %v754 = vunpack.c.l.b16 %v367
      %v755 = vunpack.c.l.b16 %v368
      %v756 = vunpack.c.l.b16 %v369
      %v757 = vunpack.c.l.b16 %v370
      %v758 = vunpack.c.l.b16 %v371
      %v759 = vunpack.c.l.b16 %v372
      %v760 = vunpack.c.l.b16 %v373
      %v761 = vunpack.c.l.b16 %v374
      %v762 = vunpack.c.l.b16 %v375
      %v763 = vunpack.c.l.b16 %v376
      %v764 = vunpack.c.l.b16 %v377
      %v765 = vunpack.c.l.b16 %v378
      %v766 = vunpack.c.l.b16 %v379
      %v767 = vunpack.c.l.b16 %v380
      %v768 = vunpack.c.l.b16 %v381
      %v769 = vunpack.c.l.b16 %v382
      %v770 = vunpack.c.l.b16 %v383
      %v771 = vunpack.c.l.b16 %v384
      %v772 = vunpack.c.l.b16 %v385
      %v773 = vunpack.c.l.b16 %v386
      %v774 = vunpack.c.l.b16 %v387
      %v775 = vunpack.c.l.b16 %v388
      %v776 = vunpack.c.l.b16 %v389
      %v777 = vunpack.c.l.b16 %v390
      %v778 = vunpack.c.l.b16 %v391
      %v779 = vunpack.c.l.b16 %v392
      %v780 = vunpack.c.l.b16 %v393
      %v781 = vunpack.c.l.b16 %v394
      %v782 = vunpack.c.l.b16 %v395
      %v783 = vunpack.c.l.b16 %v396
      %v784 = vunpack.c.l.b16 %v397
      %v785 = vunpack.c.l.b16 %v398
      %v786 = vunpack.c.l.b16 %v399
      %v787 = vunpack.c.l.b16 %v400
      %v788 = vunpack.c.l.b16 %v401
      %v789 = vunpack.c.l.b16 %v402
      %v790 = vunpack.c.l.b16 %v403
      %v791 = vunpack.c.l.b16 %v404
      %v792 = vunpack.c.l.b16 %v405
      %v793 = vunpack.c.l.b16 %v406
      %v794 = vunpack.c.l.b16 %v407
      %v795 = vunpack.c.l.b16 %v408
      %v796 = vunpack.c.l.b16 %v409
      %v797 = vunpack.c.l.b16 %v410
      %v798 = vunpack.c.l.b16 %v411
      %v799 = vunpack.c.l.b16 %v412
      %v800 = vunpack.c.l.b16 %v413
      %v801 = vunpack.c.l.b16 %v414
      %v802 = vunpack.c.l.b16 %v415
      %v803 = vunpack.c.l.b16 %v416
      %v804 = vunpack.c.l.b16 %v417
      %v805 = vunpack.c.l.b16 %v418
      %v806 = vunpack.c.l.b16 %v419
      %v807 = vunpack.c.l.b16 %v420
      %v808 = vunpack.c.l.b16 %v421
      %v809 = vunpack.c.l.b16 %v422
      %v810 = vunpack.c.l.b16 %v423
      %v811 = vunpack.c.l.b16 %v424
      %v812 = vunpack.c.l.b16 %v425
      %v813 = vunpack.c.l.b16 %v426
      %v814 = vunpack.c.l.b16 %v427
      %v815 = vunpack.c.l.b16 %v428
      %v816 = vunpack.c.l.b16 %v429
      %v817 = vunpack.c.l.b16 %v430
      %v818 = vunpack.c.l.b16 %v431
      %v819 = vunpack.c.l.b16 %v432
      %v820 = vunpack.c.l.b16 %v433
      %v821 = vunpack.c.l.b16 %v434
      %v822 = vunpack.c.l.b16 %v435
      %v823 = vunpack.c.l.b16 %v436
      %v824 = vunpack.c.l.b16 %v437
      %v825 = vunpack.c.l.b16 %v438
      %v826 = vunpack.c.l.b16 %v439
      %v827 = vunpack.c.l.b16 %v440
      %v828 = vunpack.c.l.b16 %v441
      %v829 = vunpack.c.l.b16 %v442
      %v830 = vunpack.c.l.b16 %v443
      %v831 = vunpack.c.l.b16 %v444
      %v832 = vpack.c.b16 %v689, %v688
      %v833 = vpack.c.b16 %v691, %v690
      %v834 = vpack.c.b16 %v693, %v692
      %v835 = vpack.c.b16 %v695, %v694
      %v836 = vpack.c.b16 %v697, %v696
      %v837 = vpack.c.b16 %v699, %v698
      %v838 = vpack.c.b16 %v701, %v700
      %v839 = vpack.c.b16 %v703, %v702
      %v840 = vpack.c.b16 %v705, %v704
      %v841 = vpack.c.b16 %v707, %v706
      %v842 = vpack.c.b16 %v709, %v708
      %v843 = vpack.c.b16 %v711, %v710
      %v844 = vpack.c.b16 %v713, %v712
      %v845 = vpack.c.b16 %v715, %v714
      %v846 = vpack.c.b16 %v717, %v716
      %v847 = vpack.c.b16 %v719, %v718
      %v848 = vpack.c.b16 %v721, %v720
      %v849 = vpack.c.b16 %v723, %v722
      %v850 = vpack.c.b16 %v725, %v724
      %v851 = vpack.c.b16 %v727, %v726
      %v852 = vpack.c.b16 %v729, %v728
      %v853 = vpack.c.b16 %v731, %v730
      %v854 = vpack.c.b16 %v733, %v732
      %v855 = vpack.c.b16 %v735, %v734
      %v856 = vpack.c.b16 %v737, %v736
      %v857 = vpack.c.b16 %v739, %v738
      %v858 = vpack.c.b16 %v741, %v740
      %v859 = vpack.c.b16 %v743, %v742
      %v860 = vpack.c.b16 %v745, %v744
      %v861 = vpack.c.b16 %v747, %v746
      %v862 = vpack.c.b16 %v749, %v748
      %v863 = vpack.c.b16 %v751, %v750
      %v864 = vpack.c.b16 %v753, %v752
      %v865 = vpack.c.b16 %v755, %v754
      %v866 = vpack.c.b16 %v757, %v756
      %v867 = vpack.c.b16 %v759, %v758
      %v868 = vpack.c.b16 %v761, %v760
      %v869 = vpack.c.b16 %v763, %v762
      %v870 = vpack.c.b16 %v765, %v764
      %v871 = vpack.c.b16 %v767, %v766
      %v872 = vpack.c.b16 %v769, %v768
      %v873 = vpack.c.b16 %v771, %v770
      %v874 = vpack.c.b16 %v773, %v772
      %v875 = vpack.c.b16 %v775, %v774
      %v876 = vpack.c.b16 %v777, %v776
      %v877 = vpack.c.b16 %v779, %v778
      %v878 = vpack.c.b16 %v781, %v780
      %v879 = vpack.c.b16 %v783, %v782
      %v880 = vpack.c.b16 %v785, %v784
      %v881 = vpack.c.b16 %v787, %v786
      %v882 = vpack.c.b16 %v789, %v788
      %v883 = vpack.c.b16 %v791, %v790
      %v884 = vpack.c.b16 %v793, %v792
      %v885 = vpack.c.b16 %v795, %v794
      %v886 = vpack.c.b16 %v797, %v796
      %v887 = vpack.c.b16 %v799, %v798
      %v888 = vpack.c.b16 %v801, %v800
      %v889 = vpack.c.b16 %v803, %v802
      %v890 = vpack.c.b16 %v805, %v804
      %v891 = vpack.c.b16 %v807, %v806
      %v892 = vpack.c.b16 %v809, %v808
      %v893 = vpack.c.b16 %v811, %v810
      %v894 = vpack.c.b16 %v813, %v812
      %v895 = vpack.c.b16 %v815, %v814
      %v896 = vpack.c.b16 %v817, %v816
      %v897 = vpack.c.b16 %v819, %v818
      %v898 = vpack.c.b16 %v821, %v820
      %v899 = vpack.c.b16 %v823, %v822
      %v900 = vpack.c.b16 %v825, %v824
      %v901 = vpack.c.b16 %v827, %v826
      %v902 = vpack.c.b16 %v829, %v828
      %v903 = vpack.c.b16 %v831, %v830
      %976 = vmatprep.subr.bf16.mxu0 0
      %977 = vmatpush1.bf16.msra.mxu0 %v839
      %978 = vmatprep.subr.bf16.mxu0 0
      %979 = vmatpush1.bf16.msra.mxu0 %v838
      %980 = vmatprep.subr.bf16.mxu0 0
      %981 = vmatpush1.bf16.msra.mxu0 %v837
      %982 = vmatprep.subr.bf16.mxu0 0
      %983 = vmatpush1.bf16.msra.mxu0 %v836
      %984 = vmatprep.subr.bf16.mxu0 0
      %985 = vmatpush1.bf16.msra.mxu0 %v835
      %986 = vmatprep.subr.bf16.mxu0 0
      %987 = vmatpush1.bf16.msra.mxu0 %v834
      %988 = vmatprep.subr.bf16.mxu0 0
      %989 = vmatpush1.bf16.msra.mxu0 %v833
      %990 = vmatprep.subr.bf16.mxu0 0
      %991 = vmatpush1.bf16.msra.mxu0 %v832
      %992 = vmatprep.subr.bf16.mxu0 0
      %993 = vmatpush2.bf16.msra.mxu0 %v847
      %994 = vmatprep.subr.bf16.mxu0 0
      %995 = vmatpush2.bf16.msra.mxu0 %v846
      %996 = vmatprep.subr.bf16.mxu0 0
      %997 = vmatpush2.bf16.msra.mxu0 %v845
      %998 = vmatprep.subr.bf16.mxu0 0
      %999 = vmatpush2.bf16.msra.mxu0 %v844
      %1000 = vmatprep.subr.bf16.mxu0 0
      %1001 = vmatpush2.bf16.msra.mxu0 %v843
      %1002 = vmatprep.subr.bf16.mxu0 0
      %1003 = vmatpush2.bf16.msra.mxu0 %v842
      %1004 = vmatprep.subr.bf16.mxu0 0
      %1005 = vmatpush2.bf16.msra.mxu0 %v841
      %1006 = vmatprep.subr.bf16.mxu0 0
      %1007 = vmatpush2.bf16.msra.mxu0 %v840
      %1008 = vmatprep.mubr.bf16.mxu0 %v509
      %1009 = vmatmul.mubr.bf16.gmra.mxu0 %v508
      %v1010 = vpop.f32.mrf.mxu0
      %v1011 = vadd.f32 %v450, %v1010
      %v1012 = vpop.f32.mrf.mxu0
      %v1013 = vpop.f32.mrf.mxu0
      %v1014 = vadd.f32 %v450, %v1013
      %v1015 = vpop.f32.mrf.mxu0
      %1016 = vmatprep.mubr.bf16.mxu0 %v518
      %1017 = vmatmul.mubr.bf16.gmra.mxu0 %v517
      %v1018 = vpop.f32.mrf.mxu0
      %v1019 = vadd.f32 %v450, %v1018
      %v1020 = vpop.f32.mrf.mxu0
      %v1021 = vpop.f32.mrf.mxu0
      %v1022 = vadd.f32 %v450, %v1021
      %v1023 = vpop.f32.mrf.mxu0
      %1024 = vdwg.mxu0
      %1025 = vmatprep.subr.bf16.mxu0 0
      %1026 = vmatpush1.bf16.msra.mxu0 %v855
      %1027 = vmatprep.subr.bf16.mxu0 0
      %1028 = vmatpush1.bf16.msra.mxu0 %v854
      %1029 = vmatprep.subr.bf16.mxu0 0
      %1030 = vmatpush1.bf16.msra.mxu0 %v853
      %1031 = vmatprep.subr.bf16.mxu0 0
      %1032 = vmatpush1.bf16.msra.mxu0 %v852
      %1033 = vmatprep.subr.bf16.mxu0 0
      %1034 = vmatpush1.bf16.msra.mxu0 %v851
      %1035 = vmatprep.subr.bf16.mxu0 0
      %1036 = vmatpush1.bf16.msra.mxu0 %v850
      %1037 = vmatprep.subr.bf16.mxu0 0
      %1038 = vmatpush1.bf16.msra.mxu0 %v849
      %1039 = vmatprep.subr.bf16.mxu0 0
      %1040 = vmatpush1.bf16.msra.mxu0 %v848
      %1041 = vmatprep.subr.bf16.mxu0 0
      %1042 = vmatpush2.bf16.msra.mxu0 %v863
      %1043 = vmatprep.subr.bf16.mxu0 0
      %1044 = vmatpush2.bf16.msra.mxu0 %v862
      %1045 = vmatprep.subr.bf16.mxu0 0
      %1046 = vmatpush2.bf16.msra.mxu0 %v861
      %1047 = vmatprep.subr.bf16.mxu0 0
      %1048 = vmatpush2.bf16.msra.mxu0 %v860
      %1049 = vmatprep.subr.bf16.mxu0 0
      %1050 = vmatpush2.bf16.msra.mxu0 %v859
      %1051 = vmatprep.subr.bf16.mxu0 0
      %1052 = vmatpush2.bf16.msra.mxu0 %v858
      %1053 = vmatprep.subr.bf16.mxu0 0
      %1054 = vmatpush2.bf16.msra.mxu0 %v857
      %1055 = vmatprep.subr.bf16.mxu0 0
      %1056 = vmatpush2.bf16.msra.mxu0 %v856
      %1057 = vmatprep.mubr.bf16.mxu0 %v511
      %1058 = vmatmul.mubr.bf16.gmra.mxu0 %v510
      %v1059 = vpop.f32.mrf.mxu0
      %v1060 = vadd.f32 %v1011, %v1059
      %v1061 = vpop.f32.mrf.mxu0
      %v1062 = vpop.f32.mrf.mxu0
      %v1063 = vadd.f32 %v1014, %v1062
      %v1064 = vpop.f32.mrf.mxu0
      %1065 = vmatprep.mubr.bf16.mxu0 %v520
      %1066 = vmatmul.mubr.bf16.gmra.mxu0 %v519
      %v1067 = vpop.f32.mrf.mxu0
      %v1068 = vadd.f32 %v1019, %v1067
      %v1069 = vpop.f32.mrf.mxu0
      %v1070 = vpop.f32.mrf.mxu0
      %v1071 = vadd.f32 %v1022, %v1070
      %v1072 = vpop.f32.mrf.mxu0
      %1073 = vdwg.mxu0
      %1074 = vmatprep.subr.bf16.mxu0 0
      %1075 = vmatpush1.bf16.msra.mxu0 %v871
      %1076 = vmatprep.subr.bf16.mxu0 0
      %1077 = vmatpush1.bf16.msra.mxu0 %v870
      %1078 = vmatprep.subr.bf16.mxu0 0
      %1079 = vmatpush1.bf16.msra.mxu0 %v869
      %1080 = vmatprep.subr.bf16.mxu0 0
      %1081 = vmatpush1.bf16.msra.mxu0 %v868
      %1082 = vmatprep.subr.bf16.mxu0 0
      %1083 = vmatpush1.bf16.msra.mxu0 %v867
      %1084 = vmatprep.subr.bf16.mxu0 0
      %1085 = vmatpush1.bf16.msra.mxu0 %v866
      %1086 = vmatprep.subr.bf16.mxu0 0
      %1087 = vmatpush1.bf16.msra.mxu0 %v865
      %1088 = vmatprep.subr.bf16.mxu0 0
      %1089 = vmatpush1.bf16.msra.mxu0 %v864
      %1090 = vmatprep.subr.bf16.mxu0 0
      %1091 = vmatpush2.bf16.msra.mxu0 %v879
      %1092 = vmatprep.subr.bf16.mxu0 0
      %1093 = vmatpush2.bf16.msra.mxu0 %v878
      %1094 = vmatprep.subr.bf16.mxu0 0
      %1095 = vmatpush2.bf16.msra.mxu0 %v877
      %1096 = vmatprep.subr.bf16.mxu0 0
      %1097 = vmatpush2.bf16.msra.mxu0 %v876
      %1098 = vmatprep.subr.bf16.mxu0 0
      %1099 = vmatpush2.bf16.msra.mxu0 %v875
      %1100 = vmatprep.subr.bf16.mxu0 0
      %1101 = vmatpush2.bf16.msra.mxu0 %v874
      %1102 = vmatprep.subr.bf16.mxu0 0
      %1103 = vmatpush2.bf16.msra.mxu0 %v873
      %1104 = vmatprep.subr.bf16.mxu0 0
      %1105 = vmatpush2.bf16.msra.mxu0 %v872
      %1106 = vmatprep.mubr.bf16.mxu0 %v513
      %1107 = vmatmul.mubr.bf16.gmra.mxu0 %v512
      %v1108 = vpop.f32.mrf.mxu0
      %v1109 = vadd.f32 %v1060, %v1108
      %v1110 = vpop.f32.mrf.mxu0
      %v1111 = vpop.f32.mrf.mxu0
      %v1112 = vadd.f32 %v1063, %v1111
      %v1113 = vpop.f32.mrf.mxu0
      %1114 = vmatprep.mubr.bf16.mxu0 %v522
      %1115 = vmatmul.mubr.bf16.gmra.mxu0 %v521
      %v1116 = vpop.f32.mrf.mxu0
      %v1117 = vadd.f32 %v1068, %v1116
      %v1118 = vpop.f32.mrf.mxu0
      %v1119 = vpop.f32.mrf.mxu0
      %v1120 = vadd.f32 %v1071, %v1119
      %v1121 = vpop.f32.mrf.mxu0
      %1122 = vdwg.mxu0
      %1123 = vmatprep.subr.bf16.mxu0 0
      %1124 = vmatpush1.bf16.msra.mxu0 %v887
      %1125 = vmatprep.subr.bf16.mxu0 0
      %1126 = vmatpush1.bf16.msra.mxu0 %v886
      %1127 = vmatprep.subr.bf16.mxu0 0
      %1128 = vmatpush1.bf16.msra.mxu0 %v885
      %1129 = vmatprep.subr.bf16.mxu0 0
      %1130 = vmatpush1.bf16.msra.mxu0 %v884
      %1131 = vmatprep.subr.bf16.mxu0 0
      %1132 = vmatpush1.bf16.msra.mxu0 %v883
      %1133 = vmatprep.subr.bf16.mxu0 0
      %1134 = vmatpush1.bf16.msra.mxu0 %v882
      %1135 = vmatprep.subr.bf16.mxu0 0
      %1136 = vmatpush1.bf16.msra.mxu0 %v881
      %1137 = vmatprep.subr.bf16.mxu0 0
      %1138 = vmatpush1.bf16.msra.mxu0 %v880
      %1139 = vmatprep.subr.bf16.mxu0 0
      %1140 = vmatpush2.bf16.msra.mxu0 %v895
      %1141 = vmatprep.subr.bf16.mxu0 0
      %1142 = vmatpush2.bf16.msra.mxu0 %v894
      %1143 = vmatprep.subr.bf16.mxu0 0
      %1144 = vmatpush2.bf16.msra.mxu0 %v893
      %1145 = vmatprep.subr.bf16.mxu0 0
      %1146 = vmatpush2.bf16.msra.mxu0 %v892
      %1147 = vmatprep.subr.bf16.mxu0 0
      %1148 = vmatpush2.bf16.msra.mxu0 %v891
      %1149 = vmatprep.subr.bf16.mxu0 0
      %1150 = vmatpush2.bf16.msra.mxu0 %v890
      %1151 = vmatprep.subr.bf16.mxu0 0
      %1152 = vmatpush2.bf16.msra.mxu0 %v889
      %1153 = vmatprep.subr.bf16.mxu0 0
      %1154 = vmatpush2.bf16.msra.mxu0 %v888
      %1155 = vmatprep.mubr.bf16.mxu0 %v515
      %1156 = vmatmul.mubr.bf16.gmra.mxu0 %v514
      %v1157 = vpop.f32.mrf.mxu0
      %v1158 = vadd.f32 %v1109, %v1157
      %v1159 = vpop.f32.mrf.mxu0
      %v1160 = vpop.f32.mrf.mxu0
      %v1161 = vadd.f32 %v1112, %v1160
      %v1162 = vpop.f32.mrf.mxu0
      %1163 = vmatprep.mubr.bf16.mxu0 %v524
      %1164 = vmatmul.mubr.bf16.gmra.mxu0 %v523
      %v1165 = vpop.f32.mrf.mxu0
      %v1166 = vadd.f32 %v1117, %v1165
      %v1167 = vpop.f32.mrf.mxu0
      %v1168 = vpop.f32.mrf.mxu0
      %v1169 = vadd.f32 %v1120, %v1168
      %v1170 = vpop.f32.mrf.mxu0
      %1171 = vdwg.mxu0
      %1172 = vmatprep.subr.bf16.mxu0 0
      %1173 = vmatpush1.bf16.msra.mxu0 %v903
      %1174 = vmatprep.subr.bf16.mxu0 0
      %1175 = vmatpush1.bf16.msra.mxu0 %v902
      %1176 = vmatprep.subr.bf16.mxu0 0
      %1177 = vmatpush1.bf16.msra.mxu0 %v901
      %1178 = vmatprep.subr.bf16.mxu0 0
      %1179 = vmatpush1.bf16.msra.mxu0 %v900
      %1180 = vmatprep.subr.bf16.mxu0 0
      %1181 = vmatpush1.bf16.msra.mxu0 %v899
      %1182 = vmatprep.subr.bf16.mxu0 0
      %1183 = vmatpush1.bf16.msra.mxu0 %v898
      %1184 = vmatprep.subr.bf16.mxu0 0
      %1185 = vmatpush1.bf16.msra.mxu0 %v897
      %1186 = vmatprep.subr.bf16.mxu0 0
      %1187 = vmatpush1.bf16.msra.mxu0 %v896
      %1188 = vmatprep.subr.bf16.mxu0 0
      %1189 = vmatpush2.bf16.msra.mxu0 0
      %1190 = vmatprep.subr.bf16.mxu0 0
      %1191 = vmatpush2.bf16.msra.mxu0 0
      %1192 = vmatprep.subr.bf16.mxu0 0
      %1193 = vmatpush2.bf16.msra.mxu0 0
      %1194 = vmatprep.subr.bf16.mxu0 0
      %1195 = vmatpush2.bf16.msra.mxu0 0
      %1196 = vmatprep.subr.bf16.mxu0 0
      %1197 = vmatpush2.bf16.msra.mxu0 0
      %1198 = vmatprep.subr.bf16.mxu0 0
      %1199 = vmatpush2.bf16.msra.mxu0 0
      %1200 = vmatprep.subr.bf16.mxu0 0
      %1201 = vmatpush2.bf16.msra.mxu0 0
      %1202 = vmatprep.subr.bf16.mxu0 0
      %1203 = vmatpush2.bf16.msra.mxu0 0
      %1204 = vmatprep.mubr.bf16.mxu0 0
      %1205 = vmatmul.mubr.bf16.gmra.mxu0 %v516
      %v1206 = vpop.f32.mrf.mxu0
      %v1207 = vadd.f32 %v1158, %v1206
      %v1208 = vpop.f32.mrf.mxu0
      %v1209 = vpop.f32.mrf.mxu0
      %v1210 = vadd.f32 %v1161, %v1209
      %v1211 = vpop.f32.mrf.mxu0
      %1212 = vmatprep.mubr.bf16.mxu0 0
      %1213 = vmatmul.mubr.bf16.gmra.mxu0 %v525
      %v1214 = vpop.f32.mrf.mxu0
      %v1215 = vadd.f32 %v1166, %v1214
      %v1216 = vpop.f32.mrf.mxu0
      %v1217 = vpop.f32.mrf.mxu0
      %v1218 = vadd.f32 %v1169, %v1217
      %v1219 = vpop.f32.mrf.mxu0
      %1220 = vdwg.mxu0
      %v1221 = vxor.u32 %v1207, 2147483648
      %v1222 = vxor.u32 %v1210, 2147483648
      %v1223 = vxor.u32 %v1215, 2147483648
      %v1224 = vxor.u32 %v1218, 2147483648
      %v1225 = vmul.f32 %v1221, 1.442695
      %v1226 = vpow.pop %v1225
      %v1227 = vmul.f32 %v1222, 1.442695
      %v1228 = vpow.pop %v1227
      %v1229 = vmul.f32 %v1223, 1.442695
      %v1230 = vpow.pop %v1229
      %v1231 = vmul.f32 %v1224, 1.442695
      %v1232 = vpow.pop %v1231
      %v1233 = vadd.f32 %v1226, 1.0
      %v1234 = vadd.f32 %v1228, 1.0
      %v1235 = vadd.f32 %v1230, 1.0
      %v1236 = vadd.f32 %v1232, 1.0
      %v1237 = vrcp.pop %v1233
      %v1238 = vmul.f32 1.0, %v1237
      %v1239 = vrcp.pop %v1234
      %v1240 = vmul.f32 1.0, %v1239
      %v1241 = vrcp.pop %v1235
      %v1242 = vmul.f32 1.0, %v1241
      %v1243 = vrcp.pop %v1236
      %v1244 = vmul.f32 1.0, %v1243
      %v1245 = vmul.f32 %v1207, %v1238
      %v1246 = vmul.f32 %v1210, %v1240
      %v1247 = vmul.f32 %v1215, %v1242
      %v1248 = vmul.f32 %v1218, %v1244
      %v1249 = vld [vmem:[%s272] sm:$0xf]
      %v1250 = vld [vmem:[%s272 + $0x4] sm:$0xf]
      %v1251 = vld [vmem:[%s272 + $0x8] sm:$0xf]
      %v1252 = vld [vmem:[%s272 + $0xc] sm:$0xf]
      %v1253 = vld [vmem:[%s4] sm:$0x3]
      %v1254 = vld [vmem:[%s5] sm:$0x1]
      %v1256 = vlaneseq
      %v1257 = vshrl.u32 %v1256, 7
      %v1258 = vsub.s32 0, %v1257
      %v1259 = vrot.slane %v1254, %v1258
      %v1265 = vunpack.c.l.b16 %v1249
      %v1266 = vunpack.c.l.b16 %v1250
      %v1267 = vunpack.c.l.b16 %v1251
      %v1268 = vunpack.c.l.b16 %v1252
      %v1269 = vpack.c.b16 %v1266, %v1265
      %v1270 = vpack.c.b16 %v1268, %v1267
      %vm1271 = vcmask 31744
      %v1273 = vsel %vm1271, %v1269, 0
      %v1276 = vsel %vm1271, %v1270, 0
      %vm1278 = vcmask 1041408
      %v1280 = vsel %vm1278, %v1253, 0
      %1282 = vmatprep.subr.bf16.mxu0 0
      %1283 = vmatpush1.bf16.msra.mxu0 0
      %1284 = vmatprep.subr.bf16.mxu0 0
      %1285 = vmatpush1.bf16.msra.mxu0 0
      %1286 = vmatprep.subr.bf16.mxu0 0
      %1287 = vmatpush1.bf16.msra.mxu0 0
      %1288 = vmatprep.subr.bf16.mxu0 0
      %1289 = vmatpush1.bf16.msra.mxu0 0
      %1290 = vmatprep.subr.bf16.mxu0 0
      %1291 = vmatpush1.bf16.msra.mxu0 0
      %1292 = vmatprep.subr.bf16.mxu0 0
      %1293 = vmatpush1.bf16.msra.mxu0 0
      %1294 = vmatprep.subr.bf16.mxu0 0
      %1295 = vmatpush1.bf16.msra.mxu0 0
      %1296 = vmatprep.subr.bf16.mxu0 0
      %1297 = vmatpush1.bf16.msra.mxu0 %v1280
      %1298 = vmatprep.subr.bf16.mxu0 0
      %1299 = vmatpush2.bf16.msra.mxu0 0
      %1300 = vmatprep.subr.bf16.mxu0 0
      %1301 = vmatpush2.bf16.msra.mxu0 0
      %1302 = vmatprep.subr.bf16.mxu0 0
      %1303 = vmatpush2.bf16.msra.mxu0 0
      %1304 = vmatprep.subr.bf16.mxu0 0
      %1305 = vmatpush2.bf16.msra.mxu0 0
      %1306 = vmatprep.subr.bf16.mxu0 0
      %1307 = vmatpush2.bf16.msra.mxu0 0
      %1308 = vmatprep.subr.bf16.mxu0 0
      %1309 = vmatpush2.bf16.msra.mxu0 0
      %1310 = vmatprep.subr.bf16.mxu0 0
      %1311 = vmatpush2.bf16.msra.mxu0 0
      %1312 = vmatprep.subr.bf16.mxu0 0
      %1313 = vmatpush2.bf16.msra.mxu0 0
      %1314 = vmatprep.mubr.bf16.mxu0 0
      %1315 = vmatmul.mubr.bf16.gmra.mxu0 %v1273
      %v1316 = vpop.f32.mrf.mxu0
      %v1317 = vadd.f32 %v1259, %v1316
      %v1318 = vpop.f32.mrf.mxu0
      %v1319 = vpop.f32.mrf.mxu0
      %v1320 = vadd.f32 %v1259, %v1319
      %v1321 = vpop.f32.mrf.mxu0
      %1322 = vmatprep.mubr.bf16.mxu0 0
      %1323 = vmatmul.mubr.bf16.gmra.mxu0 %v1276
      %v1324 = vpop.f32.mrf.mxu0
      %v1325 = vadd.f32 %v1259, %v1324
      %v1326 = vpop.f32.mrf.mxu0
      %v1327 = vpop.f32.mrf.mxu0
      %v1328 = vadd.f32 %v1259, %v1327
      %v1329 = vpop.f32.mrf.mxu0
      %1330 = vdwg.mxu0
      %v1331 = vadd.f32 %v1245, %v1317
      %v1332 = vadd.f32 %v1246, %v1320
      %v1333 = vadd.f32 %v1247, %v1325
      %v1334 = vadd.f32 %v1248, %v1328
      %v1335 = vpack.c.bf16 %v1332, %v1331
      %v1336 = vpack.c.bf16 %v1334, %v1333
      %v1339 = vunpack.c.l.b16 %v1335
      %v1340 = vunpack.c.h.b16 %v1335
      %v1341 = vunpack.c.l.b16 %v1336
      %v1342 = vunpack.c.h.b16 %v1336
      %v1343 = vpack.c.b16 %v1339, %v1339
      %v1344 = vpack.c.b16 %v1340, %v1340
      %v1345 = vpack.c.b16 %v1341, %v1341
      %v1346 = vpack.c.b16 %v1342, %v1342
      %1351 = vst [vmem:[%s278] sm:$0xf] %v1343
      %1352 = vst [vmem:[%s278 + $0x4] sm:$0xf] %v1344
      %1353 = vst [vmem:[%s278 + $0x8] sm:$0xf] %v1345
      %1354 = vst [vmem:[%s278 + $0xc] sm:$0xf] %v1346
      %s1355 = smul.u32 4, %s17
      %p1356 = scmp.lt.s32.totalorder %s1355, 15
      %s1357 = scalar_select %p1356, %s1355, 15
      %s1358 = smul.addr %s1357, 4
      %s1359 = scalar_lea.vmem %s6, %s1358
      // Predicated region
      $region45: #{_lambda_.3} parent=43 // pred_check
        %p1360 = pneg %p171
      $region46: #{_lambda_.3} parent=43 // pred_check_branch
        %1362 = sbr.rel (%p1360) target = $region48
      $region47: #{_lambda_.3} parent=43 // pred_region
        %s1363 = smul.u32 4, %s17
      $region48: #{_lambda_.3} parent=43 // pred_fallthru
        _
    $region44: #{_lambda_.3} parent=5 // pred_fallthru
      _
    %p1364 = scmp.le.s32.totalorder 2, %s12
    // Predicated region
    $region49: #{_lambda_.3} parent=5 // pred_check
      %p1365 = pneg %p1364
    $region50: #{_lambda_.3} parent=5 // pred_check_branch
      %1367 = sbr.rel (%p1365) target = $region52
    $region51: #{_lambda_.3} parent=5 // pred_region
      %s1368 = ssub.s32 %s12, 2
      // Predicated region
      $region53: #{_lambda_.3} parent=51 // pred_check
        %p1369 = pneg %p177
      $region54: #{_lambda_.3} parent=51 // pred_check_branch
        %1371 = sbr.rel (%p1369) target = $region56
      $region55: #{_lambda_.3} parent=51 // pred_region
        %s1372 = smul.u32 4, %s18
        %p1373 = scmp.lt.s32.totalorder %s1372, 15
        %s1374 = scalar_select %p1373, %s1372, 15
        %s1375 = smul.addr %s1374, 4
        %s1376 = scalar_lea.vmem %s6, %s1375
      $region56: #{_lambda_.3} parent=51 // pred_fallthru
        _
    $region52: #{_lambda_.3} parent=5 // pred_fallthru
      _
  $region6: #{_lambda_.3} parent=0 // loop_footer
    %s16 = sadd.s32 1, %s12
  $region7: #{_lambda_.3} parent=0 // loop_footer_branch
    %11 = sbr.rel target = $region3
  $region8: #{_lambda_.3} parent=0 // loop_exit
    _

</llo_original>
